<compile_context>
chip_gen: v7x
topology: tpu7x:2x2x1
jax: 0.10.0
libtpu: 0.0.40
codegen_flags: <defaults>
</compile_context>

<pallas_src>
import jax
import jax.numpy as jnp
from jax.experimental import pallas as pl
from jax.experimental.pallas import tpu as pltpu

K_IN = 28 * 28          # 784 — contraction dim of layer 1 (left unpadded)
H1 = 256
H2 = 128
N_OUT = 1
TILE_B = 512            # batch tile; sweep 512-2048 (v7x likes the larger end)


def _round_up(x, m):
    return (x + m - 1) // m * m


def _leaky_relu(x, negative_slope=0.2):
    return jnp.where(x >= 0, x, negative_slope * x)


def _stable_sigmoid(x):
    # exp of a non-positive argument only -> no overflow for large |x|.
    z = jnp.exp(-jnp.abs(x))
    inv = 1.0 / (1.0 + z)
    return jnp.where(x >= 0, inv, z * inv)


def discriminator_kernel(x_ref, w1_ref, b1_ref, w2_ref, b2_ref, w3_ref, b3_ref,
                         out_ref):
    # x tile: (tb, 784) f32 straight from HBM; cast to bf16 in-kernel (free VPU work).
    x = x_ref[...].astype(jnp.bfloat16)

    h1 = jnp.dot(x, w1_ref[...], preferred_element_type=jnp.float32) + b1_ref[...]
    h1 = _leaky_relu(h1)                                             # (tb, 256) f32

    h2 = jnp.dot(h1.astype(jnp.bfloat16), w2_ref[...],
                 preferred_element_type=jnp.float32) + b2_ref[...]
    h2 = _leaky_relu(h2)                                             # (tb, 128) f32

    # 1-wide head as an f32 lane reduction (no padded MXU pass, no 128-wide store).
    logits = jnp.sum(h2 * w3_ref[...], axis=-1, keepdims=True) + b3_ref[...]  # (tb, 1)

    out_ref[...] = _stable_sigmoid(logits).astype(out_ref.dtype)     # (tb, 1) store


def init_params(key):
    """f32 params mimicking nn.Linear's U(-1/sqrt(fan_in), 1/sqrt(fan_in)).
    Weights are (in_features, out_features); biases (1, out_features)."""
    dims = [(K_IN, H1), (H1, H2), (H2, N_OUT)]
    params = []
    keys = jax.random.split(key, 2 * len(dims))
    for i, (fan_in, fan_out) in enumerate(dims):
        bound = 1.0 / jnp.sqrt(float(fan_in))
        w = jax.random.uniform(keys[2 * i], (fan_in, fan_out),
                               minval=-bound, maxval=bound, dtype=jnp.float32)
        b = jax.random.uniform(keys[2 * i + 1], (1, fan_out),
                               minval=-bound, maxval=bound, dtype=jnp.float32)
        params += [w, b]
    return tuple(params)


def prepare_params(params):
    """Cast the big weights to bf16 (they stay VMEM-resident); keep biases and the
    1-wide head weights in f32.  The head weight is pre-transposed to a (1, 128) row
    so the kernel can do a broadcast-multiply + lane reduction."""
    w1, b1, w2, b2, w3, b3 = params
    w1p = w1.astype(jnp.bfloat16)                    # (784, 256) bf16
    w2p = w2.astype(jnp.bfloat16)                    # (256, 128) bf16
    w3_row = w3.reshape(1, H2).astype(jnp.float32)   # (1, 128) f32  (== w3.T)
    b3p = b3.reshape(1, 1).astype(jnp.float32)       # (1, 1) f32
    return w1p, b1, w2p, b2, w3_row, b3p


def discriminator_forward(img, params, *, tile_b=TILE_B):
    """img: (B, 1, 28, 28) float32 (NCHW).  Returns (B, 1) float32."""
    w1, b1, w2, b2, w3, b3 = prepare_params(params)

    B = img.shape[0]
    # Round the tile to >= 128 rows: keeps bf16 sublane packing whole and the MXU
    # M-dim well fed even for tiny batches.
    tb = min(tile_b, _round_up(max(B, 1), 128))
    B_pad = _round_up(B, tb)
    grid_b = B_pad // tb

    # Flatten (matches img.view(B, -1)); stays f32, no extra padded copy unless the
    # batch itself needs padding (zero rows; sliced off below).
    x = img.reshape(B, -1)
    if B_pad != B:
        x = jnp.pad(x, ((0, B_pad - B), (0, 0)))

    const_spec = lambda shape: pl.BlockSpec(shape, lambda i: (0, 0))  # VMEM-resident

    flops = 2 * B_pad * (K_IN * H1 + H1 * H2 + H2 * N_OUT)
    bytes_accessed = (x.size * 4
                      + w1.size * 2 + w2.size * 2 + w3.size * 4
                      + b1.size * 4 + b2.size * 4 + b3.size * 4
                      + B_pad * N_OUT * 4)

    out = pl.pallas_call(
        discriminator_kernel,
        out_shape=jax.ShapeDtypeStruct((B_pad, N_OUT), jnp.float32),
        grid=(grid_b,),
        in_specs=[
            pl.BlockSpec((tb, K_IN), lambda i: (i, 0)),   # x: tiled over batch, f32
            const_spec(w1.shape), const_spec(b1.shape),
            const_spec(w2.shape), const_spec(b2.shape),
            const_spec(w3.shape), const_spec(b3.shape),
        ],
        out_specs=pl.BlockSpec((tb, N_OUT), lambda i: (i, 0)),
        compiler_params=pltpu.CompilerParams(
            dimension_semantics=("parallel",),
            vmem_limit_bytes=32 * 1024 * 1024,
        ),
        cost_estimate=pl.CostEstimate(
            flops=int(flops),
            transcendentals=int(B_pad),
            bytes_accessed=int(bytes_accessed),
        ),
    )(x, w1, b1, w2, b2, w3, b3)

    return out[:B, :]


# ---------------------------------------------------------------------------
# References for correctness checking.

def _reference_forward_bf16(img, params):
    """Pure-JAX mirror of the kernel numerics (bf16 weights, f32 accumulation,
    f32 head reduction)."""
    w1, b1, w2, b2, w3_row, b3 = prepare_params(params)
    x = img.reshape(img.shape[0], -1).astype(jnp.bfloat16)
    h1 = _leaky_relu(jnp.dot(x, w1, preferred_element_type=jnp.float32) + b1)
    h2 = _leaky_relu(jnp.dot(h1.astype(jnp.bfloat16), w2,
                             preferred_element_type=jnp.float32) + b2)
    h3 = jnp.sum(h2 * w3_row, axis=-1, keepdims=True) + b3
    return _stable_sigmoid(h3)


def _reference_forward_f32(img, params):
    """Full-f32 PyTorch-semantics reference (sanity check for bf16 quantization)."""
    w1, b1, w2, b2, w3, b3 = params
    x = img.reshape(img.shape[0], -1)
    h = _leaky_relu(x @ w1 + b1)
    h = _leaky_relu(h @ w2 + b2)
    return jax.nn.sigmoid(h @ w3 + b3)


if __name__ == "__main__":
    key = jax.random.PRNGKey(0)
    k_img, k_params = jax.random.split(key)

    B = 8
    img = jax.random.normal(k_img, (B, 1, 28, 28), dtype=jnp.float32)  # NCHW
    params = init_params(k_params)

    out = jax.block_until_ready(discriminator_forward(img, params))
    assert out.shape == (B, 1), out.shape

    ref_bf16 = _reference_forward_bf16(img, params)
    assert jnp.allclose(out, ref_bf16, atol=2e-3, rtol=2e-3), \
        f"max abs diff vs bf16 ref: {jnp.max(jnp.abs(out - ref_bf16))}"

    ref_f32 = _reference_forward_f32(img, params)
    assert float(jnp.max(jnp.abs(out - ref_f32))) < 5e-2, \
        f"max abs diff vs f32 ref: {jnp.max(jnp.abs(out - ref_f32))}"

    print("KERNEL_OK")
</pallas_src>

<mosaic_0001>
module attributes {stable_mosaic.version = 11 : i64} {
  func.func @discriminator_kernel(%arg0: i32, %arg1: memref<128x784xf32, #tpu.memory_space<vmem>>, %arg2: memref<784x256xbf16, #tpu.memory_space<vmem>>, %arg3: memref<1x256xf32, #tpu.memory_space<vmem>>, %arg4: memref<256x128xbf16, #tpu.memory_space<vmem>>, %arg5: memref<1x128xf32, #tpu.memory_space<vmem>>, %arg6: memref<1x128xf32, #tpu.memory_space<vmem>>, %arg7: memref<1x1xf32, #tpu.memory_space<vmem>>, %arg8: memref<128x1xf32, #tpu.memory_space<vmem>>) attributes {dimension_semantics = [#tpu.dimension_semantics<parallel>], iteration_bounds = array<i64: 1>, scalar_prefetch = 0 : i64, scratch_operands = 0 : i64, tpu.core_type = #tpu.core_type<tc>, window_params = [{transform_indices = @transform_0, window_bounds = array<i64: 128, 784>}, {pipeline_mode = #tpu.pipeline_mode<synchronous>, transform_indices = @transform_1, window_bounds = array<i64: 784, 256>}, {pipeline_mode = #tpu.pipeline_mode<synchronous>, transform_indices = @transform_2, window_bounds = array<i64: 1, 256>}, {pipeline_mode = #tpu.pipeline_mode<synchronous>, transform_indices = @transform_3, window_bounds = array<i64: 256, 128>}, {pipeline_mode = #tpu.pipeline_mode<synchronous>, transform_indices = @transform_4, window_bounds = array<i64: 1, 128>}, {pipeline_mode = #tpu.pipeline_mode<synchronous>, transform_indices = @transform_5, window_bounds = array<i64: 1, 128>}, {pipeline_mode = #tpu.pipeline_mode<synchronous>, transform_indices = @transform_6, window_bounds = array<i64: 1, 1>}, {transform_indices = @transform_7, window_bounds = array<i64: 128, 1>}]} {
    %c0 = arith.constant 0 : index
    %c0_0 = arith.constant 0 : index
    %0 = vector.load %arg1[%c0, %c0_0] : memref<128x784xf32, #tpu.memory_space<vmem>>, vector<128x784xf32>
    %1 = arith.truncf %0 : vector<128x784xf32> to vector<128x784xbf16>
    %c0_1 = arith.constant 0 : index
    %c0_2 = arith.constant 0 : index
    %2 = vector.load %arg2[%c0_1, %c0_2] : memref<784x256xbf16, #tpu.memory_space<vmem>>, vector<784x256xbf16>
    %cst = arith.constant dense<0.000000e+00> : vector<128x256xf32>
    %3 = tpu.matmul %1, %2, %cst {dimension_numbers = #tpu.dot_dimension_numbers<[1], [0], [0], [1], [0, 0, 1, 1], [], []>} : vector<128x784xbf16>, vector<784x256xbf16>, vector<128x256xf32> -> vector<128x256xf32>
    %c0_3 = arith.constant 0 : index
    %c0_4 = arith.constant 0 : index
    %4 = vector.load %arg3[%c0_3, %c0_4] : memref<1x256xf32, #tpu.memory_space<vmem>>, vector<1x256xf32>
    %5 = vector.broadcast %4 : vector<1x256xf32> to vector<128x256xf32>
    %6 = arith.addf %3, %5 : vector<128x256xf32>
    %cst_5 = arith.constant 0.000000e+00 : f32
    %7 = vector.broadcast %cst_5 : f32 to vector<128x256xf32>
    %8 = arith.cmpf oge, %6, %7 : vector<128x256xf32>
    %cst_6 = arith.constant 2.000000e-01 : f32
    %9 = vector.broadcast %cst_6 : f32 to vector<128x256xf32>
    %10 = arith.mulf %9, %6 : vector<128x256xf32>
    %11 = arith.select %8, %6, %10 : vector<128x256xi1>, vector<128x256xf32>
    %12 = arith.truncf %11 : vector<128x256xf32> to vector<128x256xbf16>
    %c0_7 = arith.constant 0 : index
    %c0_8 = arith.constant 0 : index
    %13 = vector.load %arg4[%c0_7, %c0_8] : memref<256x128xbf16, #tpu.memory_space<vmem>>, vector<256x128xbf16>
    %cst_9 = arith.constant dense<0.000000e+00> : vector<128x128xf32>
    %14 = tpu.matmul %12, %13, %cst_9 {dimension_numbers = #tpu.dot_dimension_numbers<[1], [0], [0], [1], [0, 0, 1, 1], [], []>} : vector<128x256xbf16>, vector<256x128xbf16>, vector<128x128xf32> -> vector<128x128xf32>
    %c0_10 = arith.constant 0 : index
    %c0_11 = arith.constant 0 : index
    %15 = vector.load %arg5[%c0_10, %c0_11] : memref<1x128xf32, #tpu.memory_space<vmem>>, vector<1x128xf32>
    %16 = vector.broadcast %15 : vector<1x128xf32> to vector<128x128xf32>
    %17 = arith.addf %14, %16 : vector<128x128xf32>
    %cst_12 = arith.constant 0.000000e+00 : f32
    %18 = vector.broadcast %cst_12 : f32 to vector<128x128xf32>
    %19 = arith.cmpf oge, %17, %18 : vector<128x128xf32>
    %cst_13 = arith.constant 2.000000e-01 : f32
    %20 = vector.broadcast %cst_13 : f32 to vector<128x128xf32>
    %21 = arith.mulf %20, %17 : vector<128x128xf32>
    %22 = arith.select %19, %17, %21 : vector<128x128xi1>, vector<128x128xf32>
    %c0_14 = arith.constant 0 : index
    %c0_15 = arith.constant 0 : index
    %23 = vector.load %arg6[%c0_14, %c0_15] : memref<1x128xf32, #tpu.memory_space<vmem>>, vector<1x128xf32>
    %24 = vector.broadcast %23 : vector<1x128xf32> to vector<128x128xf32>
    %25 = arith.mulf %22, %24 : vector<128x128xf32>
    %cst_16 = arith.constant dense<0.000000e+00> : vector<128xf32>
    %26 = vector.multi_reduction <add>, %25, %cst_16 [1] : vector<128x128xf32> to vector<128xf32>
    %27 = vector.shape_cast %26 : vector<128xf32> to vector<128x1xf32>
    %c0_17 = arith.constant 0 : index
    %c0_18 = arith.constant 0 : index
    %28 = vector.load %arg7[%c0_17, %c0_18] : memref<1x1xf32, #tpu.memory_space<vmem>>, vector<1x1xf32>
    %29 = vector.broadcast %28 : vector<1x1xf32> to vector<128x1xf32>
    %30 = arith.addf %27, %29 : vector<128x1xf32>
    %31 = math.absf %30 : vector<128x1xf32>
    %cst_19 = arith.constant 0.000000e+00 : f32
    %32 = vector.broadcast %cst_19 : f32 to vector<128x1xf32>
    %33 = arith.subf %32, %31 : vector<128x1xf32>
    %34 = math.exp %33 : vector<128x1xf32>
    %cst_20 = arith.constant 1.000000e+00 : f32
    %35 = vector.broadcast %cst_20 : f32 to vector<128x1xf32>
    %36 = arith.addf %35, %34 : vector<128x1xf32>
    %cst_21 = arith.constant 1.000000e+00 : f32
    %37 = vector.broadcast %cst_21 : f32 to vector<128x1xf32>
    %38 = arith.divf %37, %36 : vector<128x1xf32>
    %cst_22 = arith.constant 0.000000e+00 : f32
    %39 = vector.broadcast %cst_22 : f32 to vector<128x1xf32>
    %40 = arith.cmpf oge, %30, %39 : vector<128x1xf32>
    %41 = arith.mulf %34, %38 : vector<128x1xf32>
    %42 = arith.select %40, %38, %41 : vector<128x1xi1>, vector<128x1xf32>
    %c0_23 = arith.constant 0 : index
    %c0_24 = arith.constant 0 : index
    %43 = vector.load %arg8[%c0_23, %c0_24] : memref<128x1xf32, #tpu.memory_space<vmem>>, vector<128x1xf32>
    tpu.vector_store %arg8[%c0_23, %c0_24], %42 {strides = array<i32>} : memref<128x1xf32, #tpu.memory_space<vmem>>, vector<128x1xf32>,
    return
  }
  func.func @transform_0(%arg0: i32) -> (i32, i32) {
    %c0_i32 = arith.constant 0 : i32
    %c0_i32_0 = arith.constant 0 : i32
    return %arg0, %c0_i32 : i32, i32
  }
  func.func @transform_1(%arg0: i32) -> (i32, i32) {
    %c0_i32 = arith.constant 0 : i32
    %c0_i32_0 = arith.constant 0 : i32
    %c0_i32_1 = arith.constant 0 : i32
    return %c0_i32, %c0_i32_0 : i32, i32
  }
  func.func @transform_2(%arg0: i32) -> (i32, i32) {
    %c0_i32 = arith.constant 0 : i32
    %c0_i32_0 = arith.constant 0 : i32
    %c0_i32_1 = arith.constant 0 : i32
    return %c0_i32, %c0_i32_0 : i32, i32
  }
  func.func @transform_3(%arg0: i32) -> (i32, i32) {
    %c0_i32 = arith.constant 0 : i32
    %c0_i32_0 = arith.constant 0 : i32
    %c0_i32_1 = arith.constant 0 : i32
    return %c0_i32, %c0_i32_0 : i32, i32
  }
  func.func @transform_4(%arg0: i32) -> (i32, i32) {
    %c0_i32 = arith.constant 0 : i32
    %c0_i32_0 = arith.constant 0 : i32
    %c0_i32_1 = arith.constant 0 : i32
    return %c0_i32, %c0_i32_0 : i32, i32
  }
  func.func @transform_5(%arg0: i32) -> (i32, i32) {
    %c0_i32 = arith.constant 0 : i32
    %c0_i32_0 = arith.constant 0 : i32
    %c0_i32_1 = arith.constant 0 : i32
    return %c0_i32, %c0_i32_0 : i32, i32
  }
  func.func @transform_6(%arg0: i32) -> (i32, i32) {
    %c0_i32 = arith.constant 0 : i32
    %c0_i32_0 = arith.constant 0 : i32
    %c0_i32_1 = arith.constant 0 : i32
    return %c0_i32, %c0_i32_0 : i32, i32
  }
  func.func @transform_7(%arg0: i32) -> (i32, i32) {
    %c0_i32 = arith.constant 0 : i32
    %c0_i32_0 = arith.constant 0 : i32
    return %arg0, %c0_i32 : i32, i32
  }
}

</mosaic_0001>

<llo_original>
// kernel: tpu_custom_call.1
$region0: #{tpu_custom_call.1}
  #allocation0 [shape = 'u32[]', space=smem, size = 0x4, offset = 0x4, fixed_abs, tag = 'smem constant byte address 0x4 - core index']
  #allocation1 [shape = 'u32[144,128]{1,0:T(1,128)}', space=vmem, size = 0x12000, scoped, tag = 'internal scratch']
  #allocation2 [shape = 'f32[1,1]{1,0:T(1,128)S(1)}', space=vmem, size = 0x200, scoped, tag = 'scoped memory for tpu_custom_call.1']
  %s0 = inlined_call_operand.vmem [shape: f32[128,784], index: 0, kind: input, shape index: {}]
  %s1 = inlined_call_operand.vmem [shape: bf16[784,256], index: 1, kind: input, shape index: {}]
  %s2 = inlined_call_operand.vmem [shape: f32[1,256], index: 2, kind: input, shape index: {}]
  %s3 = inlined_call_operand.vmem [shape: bf16[256,128], index: 3, kind: input, shape index: {}]
  %s4 = inlined_call_operand.vmem [shape: f32[1,128], index: 4, kind: input, shape index: {}]
  %s5 = inlined_call_operand.vmem [shape: f32[1,128], index: 5, kind: input, shape index: {}]
  %s6 = inlined_call_operand.<no memory space> [shape: f32[1,1], index: 6, kind: input, shape index: {}]
  %s7 = inlined_call_operand.vmem [shape: f32[128,1], index: 7, kind: output, shape index: {}]
  %s8 = sld [smem:[#allocation0]]
  $region38: #{tpu_custom_call.1} parent=0
    _
  %s10 = ssub.s32 1, %s8
  %s11 = scalar_select 0, %s10, %s8
  %v12 = vstv %s6
  %13 = vst [vmem:[#allocation2] sm:$0x1] %v12
  // Predicated region
  $region2: #{tpu_custom_call.1} parent=0 // pred_check
    _
  $region3: #{tpu_custom_call.1} parent=0 // pred_check_branch
    %15 = sbr.rel (0) target = $region5
  $region4: #{tpu_custom_call.1} parent=0 // pred_region
    _
  $region5: #{tpu_custom_call.1} parent=0 // pred_fallthru
    _
  // Predicated region
  $region6: #{tpu_custom_call.1} parent=0 // pred_check
    _
  $region7: #{tpu_custom_call.1} parent=0 // pred_check_branch
    %17 = sbr.rel (0) target = $region9
  $region8: #{tpu_custom_call.1} parent=0 // pred_region
    _
  $region9: #{tpu_custom_call.1} parent=0 // pred_fallthru
    _
  // Predicated region
  $region10: #{tpu_custom_call.1} parent=0 // pred_check
    _
  $region11: #{tpu_custom_call.1} parent=0 // pred_check_branch
    %19 = sbr.rel (0) target = $region13
  $region12: #{tpu_custom_call.1} parent=0 // pred_region
    _
  $region13: #{tpu_custom_call.1} parent=0 // pred_fallthru
    _
  // Predicated region
  $region14: #{tpu_custom_call.1} parent=0 // pred_check
    _
  $region15: #{tpu_custom_call.1} parent=0 // pred_check_branch
    %21 = sbr.rel (0) target = $region17
  $region16: #{tpu_custom_call.1} parent=0 // pred_region
    _
  $region17: #{tpu_custom_call.1} parent=0 // pred_fallthru
    _
  // Predicated region
  $region18: #{tpu_custom_call.1} parent=0 // pred_check
    _
  $region19: #{tpu_custom_call.1} parent=0 // pred_check_branch
    %23 = sbr.rel (0) target = $region21
  $region20: #{tpu_custom_call.1} parent=0 // pred_region
    _
  $region21: #{tpu_custom_call.1} parent=0 // pred_fallthru
    _
  // Predicated region
  $region22: #{tpu_custom_call.1} parent=0 // pred_check
    _
  $region23: #{tpu_custom_call.1} parent=0 // pred_check_branch
    %25 = sbr.rel (0) target = $region25
  $region24: #{tpu_custom_call.1} parent=0 // pred_region
    _
  $region25: #{tpu_custom_call.1} parent=0 // pred_fallthru
    _
  // Predicated region
  $region26: #{tpu_custom_call.1} parent=0 // pred_check
    _
  $region27: #{tpu_custom_call.1} parent=0 // pred_check_branch
    %27 = sbr.rel (0) target = $region29
  $region28: #{tpu_custom_call.1} parent=0 // pred_region
    _
  $region29: #{tpu_custom_call.1} parent=0 // pred_fallthru
    _
  %v29 = vld [vmem:[%s0] sm:$0xff]
  %v30 = vld [vmem:[%s0 + $0x8] sm:$0xff]
  %v31 = vld [vmem:[%s0 + $0x10] sm:$0xff]
  %v32 = vld [vmem:[%s0 + $0x18] sm:$0xff]
  %v33 = vld [vmem:[%s0 + $0x20] sm:$0xff]
  %v34 = vld [vmem:[%s0 + $0x28] sm:$0xff]
  %v35 = vld [vmem:[%s0 + $0x30] sm:$0xff]
  %v36 = vld [vmem:[%s0 + $0x38] sm:$0xff]
  %v37 = vld [vmem:[%s0 + $0x40] sm:$0xff]
  %v38 = vld [vmem:[%s0 + $0x48] sm:$0xff]
  %v39 = vld [vmem:[%s0 + $0x50] sm:$0xff]
  %v40 = vld [vmem:[%s0 + $0x58] sm:$0xff]
  %v41 = vld [vmem:[%s0 + $0x60] sm:$0xff]
  %v42 = vld [vmem:[%s0 + $0x68] sm:$0xff]
  %v43 = vld [vmem:[%s0 + $0x70] sm:$0xff]
  %v44 = vld [vmem:[%s0 + $0x78] sm:$0xff]
  %v45 = vld [vmem:[%s0 + $0x80] sm:$0xff]
  %v46 = vld [vmem:[%s0 + $0x88] sm:$0xff]
  %v47 = vld [vmem:[%s0 + $0x90] sm:$0xff]
  %v48 = vld [vmem:[%s0 + $0x98] sm:$0xff]
  %v49 = vld [vmem:[%s0 + $0xa0] sm:$0xff]
  %v50 = vld [vmem:[%s0 + $0xa8] sm:$0xff]
  %v51 = vld [vmem:[%s0 + $0xb0] sm:$0xff]
  %v52 = vld [vmem:[%s0 + $0xb8] sm:$0xff]
  %v53 = vld [vmem:[%s0 + $0xc0] sm:$0xff]
  %v54 = vld [vmem:[%s0 + $0xc8] sm:$0xff]
  %v55 = vld [vmem:[%s0 + $0xd0] sm:$0xff]
  %v56 = vld [vmem:[%s0 + $0xd8] sm:$0xff]
  %v57 = vld [vmem:[%s0 + $0xe0] sm:$0xff]
  %v58 = vld [vmem:[%s0 + $0xe8] sm:$0xff]
  %v59 = vld [vmem:[%s0 + $0xf0] sm:$0xff]
  %v60 = vld [vmem:[%s0 + $0xf8] sm:$0xff]
  %v61 = vld [vmem:[%s0 + $0x100] sm:$0xff]
  %v62 = vld [vmem:[%s0 + $0x108] sm:$0xff]
  %v63 = vld [vmem:[%s0 + $0x110] sm:$0xff]
  %v64 = vld [vmem:[%s0 + $0x118] sm:$0xff]
  %v65 = vld [vmem:[%s0 + $0x120] sm:$0xff]
  %v66 = vld [vmem:[%s0 + $0x128] sm:$0xff]
  %v67 = vld [vmem:[%s0 + $0x130] sm:$0xff]
  %v68 = vld [vmem:[%s0 + $0x138] sm:$0xff]
  %v69 = vld [vmem:[%s0 + $0x140] sm:$0xff]
  %v70 = vld [vmem:[%s0 + $0x148] sm:$0xff]
  %v71 = vld [vmem:[%s0 + $0x150] sm:$0xff]
  %v72 = vld [vmem:[%s0 + $0x158] sm:$0xff]
  %v73 = vld [vmem:[%s0 + $0x160] sm:$0xff]
  %v74 = vld [vmem:[%s0 + $0x168] sm:$0xff]
  %v75 = vld [vmem:[%s0 + $0x170] sm:$0xff]
  %v76 = vld [vmem:[%s0 + $0x178] sm:$0xff]
  %v77 = vld [vmem:[%s0 + $0x180] sm:$0xff]
  %v78 = vld [vmem:[%s0 + $0x188] sm:$0xff]
  %v79 = vld [vmem:[%s0 + $0x190] sm:$0xff]
  %v80 = vld [vmem:[%s0 + $0x198] sm:$0xff]
  %v81 = vld [vmem:[%s0 + $0x1a0] sm:$0xff]
  %v82 = vld [vmem:[%s0 + $0x1a8] sm:$0xff]
  %v83 = vld [vmem:[%s0 + $0x1b0] sm:$0xff]
  %v84 = vld [vmem:[%s0 + $0x1b8] sm:$0xff]
  %v85 = vld [vmem:[%s0 + $0x1c0] sm:$0xff]
  %v86 = vld [vmem:[%s0 + $0x1c8] sm:$0xff]
  %v87 = vld [vmem:[%s0 + $0x1d0] sm:$0xff]
  %v88 = vld [vmem:[%s0 + $0x1d8] sm:$0xff]
  %v89 = vld [vmem:[%s0 + $0x1e0] sm:$0xff]
  %v90 = vld [vmem:[%s0 + $0x1e8] sm:$0xff]
  %v91 = vld [vmem:[%s0 + $0x1f0] sm:$0xff]
  %v92 = vld [vmem:[%s0 + $0x1f8] sm:$0xff]
  %v93 = vld [vmem:[%s0 + $0x200] sm:$0xff]
  %v94 = vld [vmem:[%s0 + $0x208] sm:$0xff]
  %v95 = vld [vmem:[%s0 + $0x210] sm:$0xff]
  %v96 = vld [vmem:[%s0 + $0x218] sm:$0xff]
  %v97 = vld [vmem:[%s0 + $0x220] sm:$0xff]
  %v98 = vld [vmem:[%s0 + $0x228] sm:$0xff]
  %v99 = vld [vmem:[%s0 + $0x230] sm:$0xff]
  %v100 = vld [vmem:[%s0 + $0x238] sm:$0xff]
  %v101 = vld [vmem:[%s0 + $0x240] sm:$0xff]
  %v102 = vld [vmem:[%s0 + $0x248] sm:$0xff]
  %v103 = vld [vmem:[%s0 + $0x250] sm:$0xff]
  %v104 = vld [vmem:[%s0 + $0x258] sm:$0xff]
  %v105 = vld [vmem:[%s0 + $0x260] sm:$0xff]
  %v106 = vld [vmem:[%s0 + $0x268] sm:$0xff]
  %v107 = vld [vmem:[%s0 + $0x270] sm:$0xff]
  %v108 = vld [vmem:[%s0 + $0x278] sm:$0xff]
  %v109 = vld [vmem:[%s0 + $0x280] sm:$0xff]
  %v110 = vld [vmem:[%s0 + $0x288] sm:$0xff]
  %v111 = vld [vmem:[%s0 + $0x290] sm:$0xff]
  %v112 = vld [vmem:[%s0 + $0x298] sm:$0xff]
  %v113 = vld [vmem:[%s0 + $0x2a0] sm:$0xff]
  %v114 = vld [vmem:[%s0 + $0x2a8] sm:$0xff]
  %v115 = vld [vmem:[%s0 + $0x2b0] sm:$0xff]
  %v116 = vld [vmem:[%s0 + $0x2b8] sm:$0xff]
  %v117 = vld [vmem:[%s0 + $0x2c0] sm:$0xff]
  %v118 = vld [vmem:[%s0 + $0x2c8] sm:$0xff]
  %v119 = vld [vmem:[%s0 + $0x2d0] sm:$0xff]
  %v120 = vld [vmem:[%s0 + $0x2d8] sm:$0xff]
  %v121 = vld [vmem:[%s0 + $0x2e0] sm:$0xff]
  %v122 = vld [vmem:[%s0 + $0x2e8] sm:$0xff]
  %v123 = vld [vmem:[%s0 + $0x2f0] sm:$0xff]
  %v124 = vld [vmem:[%s0 + $0x2f8] sm:$0xff]
  %v125 = vld [vmem:[%s0 + $0x300] sm:$0xff]
  %v126 = vld [vmem:[%s0 + $0x308] sm:$0xff]
  %v127 = vld [vmem:[%s0 + $0x310] sm:$0xff]
  %v128 = vld [vmem:[%s0 + $0x318] sm:$0xff]
  %v129 = vld [vmem:[%s0 + $0x320] sm:$0xff]
  %v130 = vld [vmem:[%s0 + $0x328] sm:$0xff]
  %v131 = vld [vmem:[%s0 + $0x330] sm:$0xff]
  %v132 = vld [vmem:[%s0 + $0x338] sm:$0xff]
  %v133 = vld [vmem:[%s0 + $0x340] sm:$0xff]
  %v134 = vld [vmem:[%s0 + $0x348] sm:$0xff]
  %v135 = vld [vmem:[%s0 + $0x350] sm:$0xff]
  %v136 = vld [vmem:[%s0 + $0x358] sm:$0xff]
  %v137 = vld [vmem:[%s0 + $0x360] sm:$0xff]
  %v138 = vld [vmem:[%s0 + $0x368] sm:$0xff]
  %v139 = vld [vmem:[%s0 + $0x370] sm:$0xff]
  %v140 = vld [vmem:[%s0 + $0x378] sm:$0xff]
  %v141 = vpack.c.bf16 %v36, %v29
  %v142 = vpack.c.bf16 %v37, %v30
  %v143 = vpack.c.bf16 %v38, %v31
  %v144 = vpack.c.bf16 %v39, %v32
  %v145 = vpack.c.bf16 %v40, %v33
  %v146 = vpack.c.bf16 %v41, %v34
  %v147 = vpack.c.bf16 %v42, %v35
  %v148 = vpack.c.bf16 %v50, %v43
  %v149 = vpack.c.bf16 %v51, %v44
  %v150 = vpack.c.bf16 %v52, %v45
  %v151 = vpack.c.bf16 %v53, %v46
  %v152 = vpack.c.bf16 %v54, %v47
  %v153 = vpack.c.bf16 %v55, %v48
  %v154 = vpack.c.bf16 %v56, %v49
  %v155 = vpack.c.bf16 %v64, %v57
  %v156 = vpack.c.bf16 %v65, %v58
  %v157 = vpack.c.bf16 %v66, %v59
  %v158 = vpack.c.bf16 %v67, %v60
  %v159 = vpack.c.bf16 %v68, %v61
  %v160 = vpack.c.bf16 %v69, %v62
  %v161 = vpack.c.bf16 %v70, %v63
  %v162 = vpack.c.bf16 %v78, %v71
  %v163 = vpack.c.bf16 %v79, %v72
  %v164 = vpack.c.bf16 %v80, %v73
  %v165 = vpack.c.bf16 %v81, %v74
  %v166 = vpack.c.bf16 %v82, %v75
  %v167 = vpack.c.bf16 %v83, %v76
  %v168 = vpack.c.bf16 %v84, %v77
  %v169 = vpack.c.bf16 %v92, %v85
  %v170 = vpack.c.bf16 %v93, %v86
  %v171 = vpack.c.bf16 %v94, %v87
  %v172 = vpack.c.bf16 %v95, %v88
  %v173 = vpack.c.bf16 %v96, %v89
  %v174 = vpack.c.bf16 %v97, %v90
  %v175 = vpack.c.bf16 %v98, %v91
  %v176 = vpack.c.bf16 %v106, %v99
  %v177 = vpack.c.bf16 %v107, %v100
  %v178 = vpack.c.bf16 %v108, %v101
  %v179 = vpack.c.bf16 %v109, %v102
  %v180 = vpack.c.bf16 %v110, %v103
  %v181 = vpack.c.bf16 %v111, %v104
  %v182 = vpack.c.bf16 %v112, %v105
  %v183 = vpack.c.bf16 %v120, %v113
  %v184 = vpack.c.bf16 %v121, %v114
  %v185 = vpack.c.bf16 %v122, %v115
  %v186 = vpack.c.bf16 %v123, %v116
  %v187 = vpack.c.bf16 %v124, %v117
  %v188 = vpack.c.bf16 %v125, %v118
  %v189 = vpack.c.bf16 %v126, %v119
  %v190 = vpack.c.bf16 %v134, %v127
  %v191 = vpack.c.bf16 %v135, %v128
  %v192 = vpack.c.bf16 %v136, %v129
  %v193 = vpack.c.bf16 %v137, %v130
  %v194 = vpack.c.bf16 %v138, %v131
  %v195 = vpack.c.bf16 %v139, %v132
  %v196 = vpack.c.bf16 %v140, %v133
  %v197 = vld [vmem:[%s1] sm:$0xff]
  %v198 = vld [vmem:[%s1 + $0x8] sm:$0xff]
  %v199 = vld [vmem:[%s1 + $0x10] sm:$0xff]
  %v200 = vld [vmem:[%s1 + $0x18] sm:$0xff]
  %v201 = vld [vmem:[%s1 + $0x20] sm:$0xff]
  %v202 = vld [vmem:[%s1 + $0x28] sm:$0xff]
  %v203 = vld [vmem:[%s1 + $0x30] sm:$0xff]
  %v204 = vld [vmem:[%s1 + $0x38] sm:$0xff]
  %v205 = vld [vmem:[%s1 + $0x40] sm:$0xff]
  %v206 = vld [vmem:[%s1 + $0x48] sm:$0xff]
  %v207 = vld [vmem:[%s1 + $0x50] sm:$0xff]
  %v208 = vld [vmem:[%s1 + $0x58] sm:$0xff]
  %v209 = vld [vmem:[%s1 + $0x60] sm:$0xff]
  %v210 = vld [vmem:[%s1 + $0x68] sm:$0xff]
  %v211 = vld [vmem:[%s1 + $0x70] sm:$0xff]
  %v212 = vld [vmem:[%s1 + $0x78] sm:$0xff]
  %v213 = vld [vmem:[%s1 + $0x80] sm:$0xff]
  %v214 = vld [vmem:[%s1 + $0x88] sm:$0xff]
  %v215 = vld [vmem:[%s1 + $0x90] sm:$0xff]
  %v216 = vld [vmem:[%s1 + $0x98] sm:$0xff]
  %v217 = vld [vmem:[%s1 + $0xa0] sm:$0xff]
  %v218 = vld [vmem:[%s1 + $0xa8] sm:$0xff]
  %v219 = vld [vmem:[%s1 + $0xb0] sm:$0xff]
  %v220 = vld [vmem:[%s1 + $0xb8] sm:$0xff]
  %v221 = vld [vmem:[%s1 + $0xc0] sm:$0xff]
  %v222 = vld [vmem:[%s1 + $0xc8] sm:$0xff]
  %v223 = vld [vmem:[%s1 + $0xd0] sm:$0xff]
  %v224 = vld [vmem:[%s1 + $0xd8] sm:$0xff]
  %v225 = vld [vmem:[%s1 + $0xe0] sm:$0xff]
  %v226 = vld [vmem:[%s1 + $0xe8] sm:$0xff]
  %v227 = vld [vmem:[%s1 + $0xf0] sm:$0xff]
  %v228 = vld [vmem:[%s1 + $0xf8] sm:$0xff]
  %v229 = vld [vmem:[%s1 + $0x100] sm:$0xff]
  %v230 = vld [vmem:[%s1 + $0x108] sm:$0xff]
  %v231 = vld [vmem:[%s1 + $0x110] sm:$0xff]
  %v232 = vld [vmem:[%s1 + $0x118] sm:$0xff]
  %v233 = vld [vmem:[%s1 + $0x120] sm:$0xff]
  %v234 = vld [vmem:[%s1 + $0x128] sm:$0xff]
  %v235 = vld [vmem:[%s1 + $0x130] sm:$0xff]
  %v236 = vld [vmem:[%s1 + $0x138] sm:$0xff]
  %v237 = vld [vmem:[%s1 + $0x140] sm:$0xff]
  %v238 = vld [vmem:[%s1 + $0x148] sm:$0xff]
  %v239 = vld [vmem:[%s1 + $0x150] sm:$0xff]
  %v240 = vld [vmem:[%s1 + $0x158] sm:$0xff]
  %v241 = vld [vmem:[%s1 + $0x160] sm:$0xff]
  %v242 = vld [vmem:[%s1 + $0x168] sm:$0xff]
  %v243 = vld [vmem:[%s1 + $0x170] sm:$0xff]
  %v244 = vld [vmem:[%s1 + $0x178] sm:$0xff]
  %v245 = vld [vmem:[%s1 + $0x180] sm:$0xff]
  %v246 = vld [vmem:[%s1 + $0x188] sm:$0xff]
  %v247 = vld [vmem:[%s1 + $0x190] sm:$0xff]
  %v248 = vld [vmem:[%s1 + $0x198] sm:$0xff]
  %v249 = vld [vmem:[%s1 + $0x1a0] sm:$0xff]
  %v250 = vld [vmem:[%s1 + $0x1a8] sm:$0xff]
  %v251 = vld [vmem:[%s1 + $0x1b0] sm:$0xff]
  %v252 = vld [vmem:[%s1 + $0x1b8] sm:$0xff]
  %v253 = vld [vmem:[%s1 + $0x1c0] sm:$0xff]
  %v254 = vld [vmem:[%s1 + $0x1c8] sm:$0xff]
  %v255 = vld [vmem:[%s1 + $0x1d0] sm:$0xff]
  %v256 = vld [vmem:[%s1 + $0x1d8] sm:$0xff]
  %v257 = vld [vmem:[%s1 + $0x1e0] sm:$0xff]
  %v258 = vld [vmem:[%s1 + $0x1e8] sm:$0xff]
  %v259 = vld [vmem:[%s1 + $0x1f0] sm:$0xff]
  %v260 = vld [vmem:[%s1 + $0x1f8] sm:$0xff]
  %v261 = vld [vmem:[%s1 + $0x200] sm:$0xff]
  %v262 = vld [vmem:[%s1 + $0x208] sm:$0xff]
  %v263 = vld [vmem:[%s1 + $0x210] sm:$0xff]
  %v264 = vld [vmem:[%s1 + $0x218] sm:$0xff]
  %v265 = vld [vmem:[%s1 + $0x220] sm:$0xff]
  %v266 = vld [vmem:[%s1 + $0x228] sm:$0xff]
  %v267 = vld [vmem:[%s1 + $0x230] sm:$0xff]
  %v268 = vld [vmem:[%s1 + $0x238] sm:$0xff]
  %v269 = vld [vmem:[%s1 + $0x240] sm:$0xff]
  %v270 = vld [vmem:[%s1 + $0x248] sm:$0xff]
  %v271 = vld [vmem:[%s1 + $0x250] sm:$0xff]
  %v272 = vld [vmem:[%s1 + $0x258] sm:$0xff]
  %v273 = vld [vmem:[%s1 + $0x260] sm:$0xff]
  %v274 = vld [vmem:[%s1 + $0x268] sm:$0xff]
  %v275 = vld [vmem:[%s1 + $0x270] sm:$0xff]
  %v276 = vld [vmem:[%s1 + $0x278] sm:$0xff]
  %v277 = vld [vmem:[%s1 + $0x280] sm:$0xff]
  %v278 = vld [vmem:[%s1 + $0x288] sm:$0xff]
  %v279 = vld [vmem:[%s1 + $0x290] sm:$0xff]
  %v280 = vld [vmem:[%s1 + $0x298] sm:$0xff]
  %v281 = vld [vmem:[%s1 + $0x2a0] sm:$0xff]
  %v282 = vld [vmem:[%s1 + $0x2a8] sm:$0xff]
  %v283 = vld [vmem:[%s1 + $0x2b0] sm:$0xff]
  %v284 = vld [vmem:[%s1 + $0x2b8] sm:$0xff]
  %v285 = vld [vmem:[%s1 + $0x2c0] sm:$0xff]
  %v286 = vld [vmem:[%s1 + $0x2c8] sm:$0xff]
  %v287 = vld [vmem:[%s1 + $0x2d0] sm:$0xff]
  %v288 = vld [vmem:[%s1 + $0x2d8] sm:$0xff]
  %v289 = vld [vmem:[%s1 + $0x2e0] sm:$0xff]
  %v290 = vld [vmem:[%s1 + $0x2e8] sm:$0xff]
  %v291 = vld [vmem:[%s1 + $0x2f0] sm:$0xff]
  %v292 = vld [vmem:[%s1 + $0x2f8] sm:$0xff]
  %v293 = vld [vmem:[%s1 + $0x300] sm:$0xff]
  %v294 = vld [vmem:[%s1 + $0x308] sm:$0xff]
  %v295 = vld [vmem:[%s2] sm:$0x3]
  %v297 = vlaneseq
  %v298 = vshrl.u32 %v297, 7
  %v299 = vsub.s32 0, %v298
  %v300 = vrot.slane %v295, %v299
  %v301 = vlaneseq
  %v302 = vshrl.u32 %v301, 7
  %v303 = vsub.s32 1, %v302
  %v304 = vrot.slane %v295, %v303
  %v405 = vunpack.c.l.b16 %v197
  %v406 = vunpack.c.h.b16 %v197
  %v407 = vunpack.c.l.b16 %v198
  %v408 = vunpack.c.h.b16 %v198
  %v409 = vunpack.c.l.b16 %v199
  %v410 = vunpack.c.h.b16 %v199
  %v411 = vunpack.c.l.b16 %v200
  %v412 = vunpack.c.h.b16 %v200
  %v413 = vunpack.c.l.b16 %v201
  %v414 = vunpack.c.h.b16 %v201
  %v415 = vunpack.c.l.b16 %v202
  %v416 = vunpack.c.h.b16 %v202
  %v417 = vunpack.c.l.b16 %v203
  %v418 = vunpack.c.h.b16 %v203
  %v419 = vunpack.c.l.b16 %v204
  %v420 = vunpack.c.h.b16 %v204
  %v421 = vunpack.c.l.b16 %v205
  %v422 = vunpack.c.h.b16 %v205
  %v423 = vunpack.c.l.b16 %v206
  %v424 = vunpack.c.h.b16 %v206
  %v425 = vunpack.c.l.b16 %v207
  %v426 = vunpack.c.h.b16 %v207
  %v427 = vunpack.c.l.b16 %v208
  %v428 = vunpack.c.h.b16 %v208
  %v429 = vunpack.c.l.b16 %v209
  %v430 = vunpack.c.h.b16 %v209
  %v431 = vunpack.c.l.b16 %v210
  %v432 = vunpack.c.h.b16 %v210
  %v433 = vunpack.c.l.b16 %v211
  %v434 = vunpack.c.h.b16 %v211
  %v435 = vunpack.c.l.b16 %v212
  %v436 = vunpack.c.h.b16 %v212
  %v437 = vunpack.c.l.b16 %v213
  %v438 = vunpack.c.h.b16 %v213
  %v439 = vunpack.c.l.b16 %v214
  %v440 = vunpack.c.h.b16 %v214
  %v441 = vunpack.c.l.b16 %v215
  %v442 = vunpack.c.h.b16 %v215
  %v443 = vunpack.c.l.b16 %v216
  %v444 = vunpack.c.h.b16 %v216
  %v445 = vunpack.c.l.b16 %v217
  %v446 = vunpack.c.h.b16 %v217
  %v447 = vunpack.c.l.b16 %v218
  %v448 = vunpack.c.h.b16 %v218
  %v449 = vunpack.c.l.b16 %v219
  %v450 = vunpack.c.h.b16 %v219
  %v451 = vunpack.c.l.b16 %v220
  %v452 = vunpack.c.h.b16 %v220
  %v453 = vunpack.c.l.b16 %v221
  %v454 = vunpack.c.h.b16 %v221
  %v455 = vunpack.c.l.b16 %v222
  %v456 = vunpack.c.h.b16 %v222
  %v457 = vunpack.c.l.b16 %v223
  %v458 = vunpack.c.h.b16 %v223
  %v459 = vunpack.c.l.b16 %v224
  %v460 = vunpack.c.h.b16 %v224
  %v461 = vunpack.c.l.b16 %v225
  %v462 = vunpack.c.h.b16 %v225
  %v463 = vunpack.c.l.b16 %v226
  %v464 = vunpack.c.h.b16 %v226
  %v465 = vunpack.c.l.b16 %v227
  %v466 = vunpack.c.h.b16 %v227
  %v467 = vunpack.c.l.b16 %v228
  %v468 = vunpack.c.h.b16 %v228
  %v469 = vunpack.c.l.b16 %v229
  %v470 = vunpack.c.h.b16 %v229
  %v471 = vunpack.c.l.b16 %v230
  %v472 = vunpack.c.h.b16 %v230
  %v473 = vunpack.c.l.b16 %v231
  %v474 = vunpack.c.h.b16 %v231
  %v475 = vunpack.c.l.b16 %v232
  %v476 = vunpack.c.h.b16 %v232
  %v477 = vunpack.c.l.b16 %v233
  %v478 = vunpack.c.h.b16 %v233
  %v479 = vunpack.c.l.b16 %v234
  %v480 = vunpack.c.h.b16 %v234
  %v481 = vunpack.c.l.b16 %v235
  %v482 = vunpack.c.h.b16 %v235
  %v483 = vunpack.c.l.b16 %v236
  %v484 = vunpack.c.h.b16 %v236
  %v485 = vunpack.c.l.b16 %v237
  %v486 = vunpack.c.h.b16 %v237
  %v487 = vunpack.c.l.b16 %v238
  %v488 = vunpack.c.h.b16 %v238
  %v489 = vunpack.c.l.b16 %v239
  %v490 = vunpack.c.h.b16 %v239
  %v491 = vunpack.c.l.b16 %v240
  %v492 = vunpack.c.h.b16 %v240
  %v493 = vunpack.c.l.b16 %v241
  %v494 = vunpack.c.h.b16 %v241
  %v495 = vunpack.c.l.b16 %v242
  %v496 = vunpack.c.h.b16 %v242
  %v497 = vunpack.c.l.b16 %v243
  %v498 = vunpack.c.h.b16 %v243
  %v499 = vunpack.c.l.b16 %v244
  %v500 = vunpack.c.h.b16 %v244
  %v501 = vunpack.c.l.b16 %v245
  %v502 = vunpack.c.h.b16 %v245
  %v503 = vunpack.c.l.b16 %v246
  %v504 = vunpack.c.h.b16 %v246
  %v505 = vunpack.c.l.b16 %v247
  %v506 = vunpack.c.h.b16 %v247
  %v507 = vunpack.c.l.b16 %v248
  %v508 = vunpack.c.h.b16 %v248
  %v509 = vunpack.c.l.b16 %v249
  %v510 = vunpack.c.h.b16 %v249
  %v511 = vunpack.c.l.b16 %v250
  %v512 = vunpack.c.h.b16 %v250
  %v513 = vunpack.c.l.b16 %v251
  %v514 = vunpack.c.h.b16 %v251
  %v515 = vunpack.c.l.b16 %v252
  %v516 = vunpack.c.h.b16 %v252
  %v517 = vunpack.c.l.b16 %v253
  %v518 = vunpack.c.h.b16 %v253
  %v519 = vunpack.c.l.b16 %v254
  %v520 = vunpack.c.h.b16 %v254
  %v521 = vunpack.c.l.b16 %v255
  %v522 = vunpack.c.h.b16 %v255
  %v523 = vunpack.c.l.b16 %v256
  %v524 = vunpack.c.h.b16 %v256
  %v525 = vunpack.c.l.b16 %v257
  %v526 = vunpack.c.h.b16 %v257
  %v527 = vunpack.c.l.b16 %v258
  %v528 = vunpack.c.h.b16 %v258
  %v529 = vunpack.c.l.b16 %v259
  %v530 = vunpack.c.h.b16 %v259
  %v531 = vunpack.c.l.b16 %v260
  %v532 = vunpack.c.h.b16 %v260
  %v533 = vunpack.c.l.b16 %v261
  %v534 = vunpack.c.h.b16 %v261
  %v535 = vunpack.c.l.b16 %v262
  %v536 = vunpack.c.h.b16 %v262
  %v537 = vunpack.c.l.b16 %v263
  %v538 = vunpack.c.h.b16 %v263
  %v539 = vunpack.c.l.b16 %v264
  %v540 = vunpack.c.h.b16 %v264
  %v541 = vunpack.c.l.b16 %v265
  %v542 = vunpack.c.h.b16 %v265
  %v543 = vunpack.c.l.b16 %v266
  %v544 = vunpack.c.h.b16 %v266
  %v545 = vunpack.c.l.b16 %v267
  %v546 = vunpack.c.h.b16 %v267
  %v547 = vunpack.c.l.b16 %v268
  %v548 = vunpack.c.h.b16 %v268
  %v549 = vunpack.c.l.b16 %v269
  %v550 = vunpack.c.h.b16 %v269
  %v551 = vunpack.c.l.b16 %v270
  %v552 = vunpack.c.h.b16 %v270
  %v553 = vunpack.c.l.b16 %v271
  %v554 = vunpack.c.h.b16 %v271
  %v555 = vunpack.c.l.b16 %v272
  %v556 = vunpack.c.h.b16 %v272
  %v557 = vunpack.c.l.b16 %v273
  %v558 = vunpack.c.h.b16 %v273
  %v559 = vunpack.c.l.b16 %v274
  %v560 = vunpack.c.h.b16 %v274
  %v561 = vunpack.c.l.b16 %v275
  %v562 = vunpack.c.h.b16 %v275
  %v563 = vunpack.c.l.b16 %v276
  %v564 = vunpack.c.h.b16 %v276
  %v565 = vunpack.c.l.b16 %v277
  %v566 = vunpack.c.h.b16 %v277
  %v567 = vunpack.c.l.b16 %v278
  %v568 = vunpack.c.h.b16 %v278
  %v569 = vunpack.c.l.b16 %v279
  %v570 = vunpack.c.h.b16 %v279
  %v571 = vunpack.c.l.b16 %v280
  %v572 = vunpack.c.h.b16 %v280
  %v573 = vunpack.c.l.b16 %v281
  %v574 = vunpack.c.h.b16 %v281
  %v575 = vunpack.c.l.b16 %v282
  %v576 = vunpack.c.h.b16 %v282
  %v577 = vunpack.c.l.b16 %v283
  %v578 = vunpack.c.h.b16 %v283
  %v579 = vunpack.c.l.b16 %v284
  %v580 = vunpack.c.h.b16 %v284
  %v581 = vunpack.c.l.b16 %v285
  %v582 = vunpack.c.h.b16 %v285
  %v583 = vunpack.c.l.b16 %v286
  %v584 = vunpack.c.h.b16 %v286
  %v585 = vunpack.c.l.b16 %v287
  %v586 = vunpack.c.h.b16 %v287
  %v587 = vunpack.c.l.b16 %v288
  %v588 = vunpack.c.h.b16 %v288
  %v589 = vunpack.c.l.b16 %v289
  %v590 = vunpack.c.h.b16 %v289
  %v591 = vunpack.c.l.b16 %v290
  %v592 = vunpack.c.h.b16 %v290
  %v593 = vunpack.c.l.b16 %v291
  %v594 = vunpack.c.h.b16 %v291
  %v595 = vunpack.c.l.b16 %v292
  %v596 = vunpack.c.h.b16 %v292
  %v597 = vunpack.c.l.b16 %v293
  %v598 = vunpack.c.h.b16 %v293
  %v599 = vunpack.c.l.b16 %v294
  %v600 = vunpack.c.h.b16 %v294
  %v601 = vpack.c.b16 %v407, %v405
  %v602 = vpack.c.b16 %v408, %v406
  %v603 = vpack.c.b16 %v411, %v409
  %v604 = vpack.c.b16 %v412, %v410
  %v605 = vpack.c.b16 %v415, %v413
  %v606 = vpack.c.b16 %v416, %v414
  %v607 = vpack.c.b16 %v419, %v417
  %v608 = vpack.c.b16 %v420, %v418
  %v609 = vpack.c.b16 %v423, %v421
  %v610 = vpack.c.b16 %v424, %v422
  %v611 = vpack.c.b16 %v427, %v425
  %v612 = vpack.c.b16 %v428, %v426
  %v613 = vpack.c.b16 %v431, %v429
  %v614 = vpack.c.b16 %v432, %v430
  %v615 = vpack.c.b16 %v435, %v433
  %v616 = vpack.c.b16 %v436, %v434
  %v617 = vpack.c.b16 %v439, %v437
  %v618 = vpack.c.b16 %v440, %v438
  %v619 = vpack.c.b16 %v443, %v441
  %v620 = vpack.c.b16 %v444, %v442
  %v621 = vpack.c.b16 %v447, %v445
  %v622 = vpack.c.b16 %v448, %v446
  %v623 = vpack.c.b16 %v451, %v449
  %v624 = vpack.c.b16 %v452, %v450
  %v625 = vpack.c.b16 %v455, %v453
  %v626 = vpack.c.b16 %v456, %v454
  %v627 = vpack.c.b16 %v459, %v457
  %v628 = vpack.c.b16 %v460, %v458
  %v629 = vpack.c.b16 %v463, %v461
  %v630 = vpack.c.b16 %v464, %v462
  %v631 = vpack.c.b16 %v467, %v465
  %v632 = vpack.c.b16 %v468, %v466
  %v633 = vpack.c.b16 %v471, %v469
  %v634 = vpack.c.b16 %v472, %v470
  %v635 = vpack.c.b16 %v475, %v473
  %v636 = vpack.c.b16 %v476, %v474
  %v637 = vpack.c.b16 %v479, %v477
  %v638 = vpack.c.b16 %v480, %v478
  %v639 = vpack.c.b16 %v483, %v481
  %v640 = vpack.c.b16 %v484, %v482
  %v641 = vpack.c.b16 %v487, %v485
  %v642 = vpack.c.b16 %v488, %v486
  %v643 = vpack.c.b16 %v491, %v489
  %v644 = vpack.c.b16 %v492, %v490
  %v645 = vpack.c.b16 %v495, %v493
  %v646 = vpack.c.b16 %v496, %v494
  %v647 = vpack.c.b16 %v499, %v497
  %v648 = vpack.c.b16 %v500, %v498
  %v649 = vpack.c.b16 %v503, %v501
  %v650 = vpack.c.b16 %v504, %v502
  %v651 = vpack.c.b16 %v507, %v505
  %v652 = vpack.c.b16 %v508, %v506
  %v653 = vpack.c.b16 %v511, %v509
  %v654 = vpack.c.b16 %v512, %v510
  %v655 = vpack.c.b16 %v515, %v513
  %v656 = vpack.c.b16 %v516, %v514
  %v657 = vpack.c.b16 %v519, %v517
  %v658 = vpack.c.b16 %v520, %v518
  %v659 = vpack.c.b16 %v523, %v521
  %v660 = vpack.c.b16 %v524, %v522
  %v661 = vpack.c.b16 %v527, %v525
  %v662 = vpack.c.b16 %v528, %v526
  %v663 = vpack.c.b16 %v531, %v529
  %v664 = vpack.c.b16 %v532, %v530
  %v665 = vpack.c.b16 %v535, %v533
  %v666 = vpack.c.b16 %v536, %v534
  %v667 = vpack.c.b16 %v539, %v537
  %v668 = vpack.c.b16 %v540, %v538
  %v669 = vpack.c.b16 %v543, %v541
  %v670 = vpack.c.b16 %v544, %v542
  %v671 = vpack.c.b16 %v547, %v545
  %v672 = vpack.c.b16 %v548, %v546
  %v673 = vpack.c.b16 %v551, %v549
  %v674 = vpack.c.b16 %v552, %v550
  %v675 = vpack.c.b16 %v555, %v553
  %v676 = vpack.c.b16 %v556, %v554
  %v677 = vpack.c.b16 %v559, %v557
  %v678 = vpack.c.b16 %v560, %v558
  %v679 = vpack.c.b16 %v563, %v561
  %v680 = vpack.c.b16 %v564, %v562
  %v681 = vpack.c.b16 %v567, %v565
  %v682 = vpack.c.b16 %v568, %v566
  %v683 = vpack.c.b16 %v571, %v569
  %v684 = vpack.c.b16 %v572, %v570
  %v685 = vpack.c.b16 %v575, %v573
  %v686 = vpack.c.b16 %v576, %v574
  %v687 = vpack.c.b16 %v579, %v577
  %v688 = vpack.c.b16 %v580, %v578
  %v689 = vpack.c.b16 %v583, %v581
  %v690 = vpack.c.b16 %v584, %v582
  %v691 = vpack.c.b16 %v587, %v585
  %v692 = vpack.c.b16 %v588, %v586
  %v693 = vpack.c.b16 %v591, %v589
  %v694 = vpack.c.b16 %v592, %v590
  %v695 = vpack.c.b16 %v595, %v593
  %v696 = vpack.c.b16 %v596, %v594
  %v697 = vpack.c.b16 %v599, %v597
  %v698 = vpack.c.b16 %v600, %v598
  %vm797 = vcmask 130048
  %v799 = vsel %vm797, %v147, 0
  %v802 = vsel %vm797, %v154, 0
  %v805 = vsel %vm797, %v161, 0
  %v808 = vsel %vm797, %v168, 0
  %v811 = vsel %vm797, %v175, 0
  %v814 = vsel %vm797, %v182, 0
  %v817 = vsel %vm797, %v189, 0
  %v820 = vsel %vm797, %v196, 0
  %822 = vmatprep.subr.bf16.mxu0 %v602
  %823 = vmatpush1.bf16.msra.mxu0 %v601
  %824 = vmatprep.subr.bf16.mxu0 %v604
  %825 = vmatpush1.bf16.msra.mxu0 %v603
  %826 = vmatprep.subr.bf16.mxu0 %v606
  %827 = vmatpush1.bf16.msra.mxu0 %v605
  %828 = vmatprep.subr.bf16.mxu0 %v608
  %829 = vmatpush1.bf16.msra.mxu0 %v607
  %830 = vmatprep.subr.bf16.mxu0 %v610
  %831 = vmatpush1.bf16.msra.mxu0 %v609
  %832 = vmatprep.subr.bf16.mxu0 %v612
  %833 = vmatpush1.bf16.msra.mxu0 %v611
  %834 = vmatprep.subr.bf16.mxu0 %v614
  %835 = vmatpush1.bf16.msra.mxu0 %v613
  %836 = vmatprep.subr.bf16.mxu0 %v616
  %837 = vmatpush1.bf16.msra.mxu0 %v615
  %838 = vmatprep.subr.bf16.mxu0 %v618
  %839 = vmatpush1.bf16.msra.mxu0 %v617
  %840 = vmatprep.subr.bf16.mxu0 %v620
  %841 = vmatpush1.bf16.msra.mxu0 %v619
  %842 = vmatprep.subr.bf16.mxu0 %v622
  %843 = vmatpush1.bf16.msra.mxu0 %v621
  %844 = vmatprep.subr.bf16.mxu0 %v624
  %845 = vmatpush1.bf16.msra.mxu0 %v623
  %846 = vmatprep.subr.bf16.mxu0 %v626
  %847 = vmatpush1.bf16.msra.mxu0 %v625
  %848 = vmatprep.subr.bf16.mxu0 %v628
  %849 = vmatpush1.bf16.msra.mxu0 %v627
  %850 = vmatprep.subr.bf16.mxu0 %v630
  %851 = vmatpush1.bf16.msra.mxu0 %v629
  %852 = vmatprep.subr.bf16.mxu0 %v632
  %853 = vmatpush1.bf16.msra.mxu0 %v631
  %854 = vmatprep.mubr.bf16.mxu0 %v142
  %855 = vmatmul.mubr.bf16.gmra.mrb[0].mxu0 %v141
  %v856 = vpop.f32.mrb[0].mxu0
  %v857 = vadd.f32 %v300, %v856
  %v858 = vpop.f32.mrb[0].mxu0
  %v859 = vadd.f32 %v304, %v858
  %v860 = vpop.f32.mrb[0].mxu0
  %v861 = vadd.f32 %v300, %v860
  %v862 = vpop.f32.mrb[0].mxu0
  %v863 = vadd.f32 %v304, %v862
  %864 = vmatprep.mubr.bf16.mxu0 %v149
  %865 = vmatmul.mubr.bf16.gmra.mrb[0].mxu0 %v148
  %v866 = vpop.f32.mrb[0].mxu0
  %v867 = vadd.f32 %v300, %v866
  %v868 = vpop.f32.mrb[0].mxu0
  %v869 = vadd.f32 %v304, %v868
  %v870 = vpop.f32.mrb[0].mxu0
  %v871 = vadd.f32 %v300, %v870
  %v872 = vpop.f32.mrb[0].mxu0
  %v873 = vadd.f32 %v304, %v872
  %874 = vmatprep.mubr.bf16.mxu0 %v156
  %875 = vmatmul.mubr.bf16.gmra.mrb[0].mxu0 %v155
  %v876 = vpop.f32.mrb[0].mxu0
  %v877 = vadd.f32 %v300, %v876
  %v878 = vpop.f32.mrb[0].mxu0
  %v879 = vadd.f32 %v304, %v878
  %v880 = vpop.f32.mrb[0].mxu0
  %v881 = vadd.f32 %v300, %v880
  %v882 = vpop.f32.mrb[0].mxu0
  %v883 = vadd.f32 %v304, %v882
  %884 = vmatprep.mubr.bf16.mxu0 %v163
  %885 = vmatmul.mubr.bf16.gmra.mrb[0].mxu0 %v162
  %v886 = vpop.f32.mrb[0].mxu0
  %v887 = vadd.f32 %v300, %v886
  %v888 = vpop.f32.mrb[0].mxu0
  %v889 = vadd.f32 %v304, %v888
  %v890 = vpop.f32.mrb[0].mxu0
  %v891 = vadd.f32 %v300, %v890
  %v892 = vpop.f32.mrb[0].mxu0
  %v893 = vadd.f32 %v304, %v892
  %894 = vmatprep.mubr.bf16.mxu0 %v170
  %895 = vmatmul.mubr.bf16.gmra.mrb[0].mxu0 %v169
  %v896 = vpop.f32.mrb[0].mxu0
  %v897 = vadd.f32 %v300, %v896
  %v898 = vpop.f32.mrb[0].mxu0
  %v899 = vadd.f32 %v304, %v898
  %v900 = vpop.f32.mrb[0].mxu0
  %v901 = vadd.f32 %v300, %v900
  %v902 = vpop.f32.mrb[0].mxu0
  %v903 = vadd.f32 %v304, %v902
  %904 = vmatprep.mubr.bf16.mxu0 %v177
  %905 = vmatmul.mubr.bf16.gmra.mrb[0].mxu0 %v176
  %v906 = vpop.f32.mrb[0].mxu0
  %v907 = vadd.f32 %v300, %v906
  %v908 = vpop.f32.mrb[0].mxu0
  %v909 = vadd.f32 %v304, %v908
  %v910 = vpop.f32.mrb[0].mxu0
  %v911 = vadd.f32 %v300, %v910
  %v912 = vpop.f32.mrb[0].mxu0
  %v913 = vadd.f32 %v304, %v912
  %914 = vmatprep.mubr.bf16.mxu0 %v184
  %915 = vmatmul.mubr.bf16.gmra.mrb[0].mxu0 %v183
  %v916 = vpop.f32.mrb[0].mxu0
  %v917 = vadd.f32 %v300, %v916
  %v918 = vpop.f32.mrb[0].mxu0
  %v919 = vadd.f32 %v304, %v918
  %v920 = vpop.f32.mrb[0].mxu0
  %v921 = vadd.f32 %v300, %v920
  %v922 = vpop.f32.mrb[0].mxu0
  %v923 = vadd.f32 %v304, %v922
  %924 = vmatprep.mubr.bf16.mxu0 %v191
  %925 = vmatmul.mubr.bf16.gmra.mrb[0].mxu0 %v190
  %v926 = vpop.f32.mrb[0].mxu0
  %v927 = vadd.f32 %v300, %v926
  %v928 = vpop.f32.mrb[0].mxu0
  %v929 = vadd.f32 %v304, %v928
  %v930 = vpop.f32.mrb[0].mxu0
  %v931 = vadd.f32 %v300, %v930
  %v932 = vpop.f32.mrb[0].mxu0
  %v933 = vadd.f32 %v304, %v932
  %934 = vdwg.mxu0
  %935 = vmatprep.subr.bf16.mxu0 %v634
  %936 = vmatpush1.bf16.msra.mxu0 %v633
  %937 = vmatprep.subr.bf16.mxu0 %v636
  %938 = vmatpush1.bf16.msra.mxu0 %v635
  %939 = vmatprep.subr.bf16.mxu0 %v638
  %940 = vmatpush1.bf16.msra.mxu0 %v637
  %941 = vmatprep.subr.bf16.mxu0 %v640
  %942 = vmatpush1.bf16.msra.mxu0 %v639
  %943 = vmatprep.subr.bf16.mxu0 %v642
  %944 = vmatpush1.bf16.msra.mxu0 %v641
  %945 = vmatprep.subr.bf16.mxu0 %v644
  %946 = vmatpush1.bf16.msra.mxu0 %v643
  %947 = vmatprep.subr.bf16.mxu0 %v646
  %948 = vmatpush1.bf16.msra.mxu0 %v645
  %949 = vmatprep.subr.bf16.mxu0 %v648
  %950 = vmatpush1.bf16.msra.mxu0 %v647
  %951 = vmatprep.subr.bf16.mxu0 %v650
  %952 = vmatpush1.bf16.msra.mxu0 %v649
  %953 = vmatprep.subr.bf16.mxu0 %v652
  %954 = vmatpush1.bf16.msra.mxu0 %v651
  %955 = vmatprep.subr.bf16.mxu0 %v654
  %956 = vmatpush1.bf16.msra.mxu0 %v653
  %957 = vmatprep.subr.bf16.mxu0 %v656
  %958 = vmatpush1.bf16.msra.mxu0 %v655
  %959 = vmatprep.subr.bf16.mxu0 %v658
  %960 = vmatpush1.bf16.msra.mxu0 %v657
  %961 = vmatprep.subr.bf16.mxu0 %v660
  %962 = vmatpush1.bf16.msra.mxu0 %v659
  %963 = vmatprep.subr.bf16.mxu0 %v662
  %964 = vmatpush1.bf16.msra.mxu0 %v661
  %965 = vmatprep.subr.bf16.mxu0 %v664
  %966 = vmatpush1.bf16.msra.mxu0 %v663
  %967 = vmatprep.mubr.bf16.mxu0 %v144
  %968 = vmatmul.mubr.bf16.gmra.mrb[0].mxu0 %v143
  %v969 = vpop.f32.mrb[0].mxu0
  %v970 = vadd.f32 %v857, %v969
  %v971 = vpop.f32.mrb[0].mxu0
  %v972 = vadd.f32 %v859, %v971
  %v973 = vpop.f32.mrb[0].mxu0
  %v974 = vadd.f32 %v861, %v973
  %v975 = vpop.f32.mrb[0].mxu0
  %v976 = vadd.f32 %v863, %v975
  %977 = vmatprep.mubr.bf16.mxu0 %v151
  %978 = vmatmul.mubr.bf16.gmra.mrb[0].mxu0 %v150
  %v979 = vpop.f32.mrb[0].mxu0
  %v980 = vadd.f32 %v867, %v979
  %v981 = vpop.f32.mrb[0].mxu0
  %v982 = vadd.f32 %v869, %v981
  %v983 = vpop.f32.mrb[0].mxu0
  %v984 = vadd.f32 %v871, %v983
  %v985 = vpop.f32.mrb[0].mxu0
  %v986 = vadd.f32 %v873, %v985
  %987 = vmatprep.mubr.bf16.mxu0 %v158
  %988 = vmatmul.mubr.bf16.gmra.mrb[0].mxu0 %v157
  %v989 = vpop.f32.mrb[0].mxu0
  %v990 = vadd.f32 %v877, %v989
  %v991 = vpop.f32.mrb[0].mxu0
  %v992 = vadd.f32 %v879, %v991
  %v993 = vpop.f32.mrb[0].mxu0
  %v994 = vadd.f32 %v881, %v993
  %v995 = vpop.f32.mrb[0].mxu0
  %v996 = vadd.f32 %v883, %v995
  %997 = vmatprep.mubr.bf16.mxu0 %v165
  %998 = vmatmul.mubr.bf16.gmra.mrb[0].mxu0 %v164
  %v999 = vpop.f32.mrb[0].mxu0
  %v1000 = vadd.f32 %v887, %v999
  %v1001 = vpop.f32.mrb[0].mxu0
  %v1002 = vadd.f32 %v889, %v1001
  %v1003 = vpop.f32.mrb[0].mxu0
  %v1004 = vadd.f32 %v891, %v1003
  %v1005 = vpop.f32.mrb[0].mxu0
  %v1006 = vadd.f32 %v893, %v1005
  %1007 = vmatprep.mubr.bf16.mxu0 %v172
  %1008 = vmatmul.mubr.bf16.gmra.mrb[0].mxu0 %v171
  %v1009 = vpop.f32.mrb[0].mxu0
  %v1010 = vadd.f32 %v897, %v1009
  %v1011 = vpop.f32.mrb[0].mxu0
  %v1012 = vadd.f32 %v899, %v1011
  %v1013 = vpop.f32.mrb[0].mxu0
  %v1014 = vadd.f32 %v901, %v1013
  %v1015 = vpop.f32.mrb[0].mxu0
  %v1016 = vadd.f32 %v903, %v1015
  %1017 = vmatprep.mubr.bf16.mxu0 %v179
  %1018 = vmatmul.mubr.bf16.gmra.mrb[0].mxu0 %v178
  %v1019 = vpop.f32.mrb[0].mxu0
  %v1020 = vadd.f32 %v907, %v1019
  %v1021 = vpop.f32.mrb[0].mxu0
  %v1022 = vadd.f32 %v909, %v1021
  %v1023 = vpop.f32.mrb[0].mxu0
  %v1024 = vadd.f32 %v911, %v1023
  %v1025 = vpop.f32.mrb[0].mxu0
  %v1026 = vadd.f32 %v913, %v1025
  %1027 = vmatprep.mubr.bf16.mxu0 %v186
  %1028 = vmatmul.mubr.bf16.gmra.mrb[0].mxu0 %v185
  %v1029 = vpop.f32.mrb[0].mxu0
  %v1030 = vadd.f32 %v917, %v1029
  %v1031 = vpop.f32.mrb[0].mxu0
  %v1032 = vadd.f32 %v919, %v1031
  %v1033 = vpop.f32.mrb[0].mxu0
  %v1034 = vadd.f32 %v921, %v1033
  %v1035 = vpop.f32.mrb[0].mxu0
  %v1036 = vadd.f32 %v923, %v1035
  %1037 = vmatprep.mubr.bf16.mxu0 %v193
  %1038 = vmatmul.mubr.bf16.gmra.mrb[0].mxu0 %v192
  %v1039 = vpop.f32.mrb[0].mxu0
  %v1040 = vadd.f32 %v927, %v1039
  %v1041 = vpop.f32.mrb[0].mxu0
  %v1042 = vadd.f32 %v929, %v1041
  %v1043 = vpop.f32.mrb[0].mxu0
  %v1044 = vadd.f32 %v931, %v1043
  %v1045 = vpop.f32.mrb[0].mxu0
  %v1046 = vadd.f32 %v933, %v1045
  %1047 = vdwg.mxu0
  %1048 = vmatprep.subr.bf16.mxu0 %v666
  %1049 = vmatpush1.bf16.msra.mxu0 %v665
  %1050 = vmatprep.subr.bf16.mxu0 %v668
  %1051 = vmatpush1.bf16.msra.mxu0 %v667
  %1052 = vmatprep.subr.bf16.mxu0 %v670
  %1053 = vmatpush1.bf16.msra.mxu0 %v669
  %1054 = vmatprep.subr.bf16.mxu0 %v672
  %1055 = vmatpush1.bf16.msra.mxu0 %v671
  %1056 = vmatprep.subr.bf16.mxu0 %v674
  %1057 = vmatpush1.bf16.msra.mxu0 %v673
  %1058 = vmatprep.subr.bf16.mxu0 %v676
  %1059 = vmatpush1.bf16.msra.mxu0 %v675
  %1060 = vmatprep.subr.bf16.mxu0 %v678
  %1061 = vmatpush1.bf16.msra.mxu0 %v677
  %1062 = vmatprep.subr.bf16.mxu0 %v680
  %1063 = vmatpush1.bf16.msra.mxu0 %v679
  %1064 = vmatprep.subr.bf16.mxu0 %v682
  %1065 = vmatpush1.bf16.msra.mxu0 %v681
  %1066 = vmatprep.subr.bf16.mxu0 %v684
  %1067 = vmatpush1.bf16.msra.mxu0 %v683
  %1068 = vmatprep.subr.bf16.mxu0 %v686
  %1069 = vmatpush1.bf16.msra.mxu0 %v685
  %1070 = vmatprep.subr.bf16.mxu0 %v688
  %1071 = vmatpush1.bf16.msra.mxu0 %v687
  %1072 = vmatprep.subr.bf16.mxu0 %v690
  %1073 = vmatpush1.bf16.msra.mxu0 %v689
  %1074 = vmatprep.subr.bf16.mxu0 %v692
  %1075 = vmatpush1.bf16.msra.mxu0 %v691
  %1076 = vmatprep.subr.bf16.mxu0 %v694
  %1077 = vmatpush1.bf16.msra.mxu0 %v693
  %1078 = vmatprep.subr.bf16.mxu0 %v696
  %1079 = vmatpush1.bf16.msra.mxu0 %v695
  %1080 = vmatprep.mubr.bf16.mxu0 %v146
  %1081 = vmatmul.mubr.bf16.gmra.mrb[0].mxu0 %v145
  %v1082 = vpop.f32.mrb[0].mxu0
  %v1083 = vadd.f32 %v970, %v1082
  %v1084 = vpop.f32.mrb[0].mxu0
  %v1085 = vadd.f32 %v972, %v1084
  %v1086 = vpop.f32.mrb[0].mxu0
  %v1087 = vadd.f32 %v974, %v1086
  %v1088 = vpop.f32.mrb[0].mxu0
  %v1089 = vadd.f32 %v976, %v1088
  %1090 = vmatprep.mubr.bf16.mxu0 %v153
  %1091 = vmatmul.mubr.bf16.gmra.mrb[0].mxu0 %v152
  %v1092 = vpop.f32.mrb[0].mxu0
  %v1093 = vadd.f32 %v980, %v1092
  %v1094 = vpop.f32.mrb[0].mxu0
  %v1095 = vadd.f32 %v982, %v1094
  %v1096 = vpop.f32.mrb[0].mxu0
  %v1097 = vadd.f32 %v984, %v1096
  %v1098 = vpop.f32.mrb[0].mxu0
  %v1099 = vadd.f32 %v986, %v1098
  %1100 = vmatprep.mubr.bf16.mxu0 %v160
  %1101 = vmatmul.mubr.bf16.gmra.mrb[0].mxu0 %v159
  %v1102 = vpop.f32.mrb[0].mxu0
  %v1103 = vadd.f32 %v990, %v1102
  %v1104 = vpop.f32.mrb[0].mxu0
  %v1105 = vadd.f32 %v992, %v1104
  %v1106 = vpop.f32.mrb[0].mxu0
  %v1107 = vadd.f32 %v994, %v1106
  %v1108 = vpop.f32.mrb[0].mxu0
  %v1109 = vadd.f32 %v996, %v1108
  %1110 = vmatprep.mubr.bf16.mxu0 %v167
  %1111 = vmatmul.mubr.bf16.gmra.mrb[0].mxu0 %v166
  %v1112 = vpop.f32.mrb[0].mxu0
  %v1113 = vadd.f32 %v1000, %v1112
  %v1114 = vpop.f32.mrb[0].mxu0
  %v1115 = vadd.f32 %v1002, %v1114
  %v1116 = vpop.f32.mrb[0].mxu0
  %v1117 = vadd.f32 %v1004, %v1116
  %v1118 = vpop.f32.mrb[0].mxu0
  %v1119 = vadd.f32 %v1006, %v1118
  %1120 = vmatprep.mubr.bf16.mxu0 %v174
  %1121 = vmatmul.mubr.bf16.gmra.mrb[0].mxu0 %v173
  %v1122 = vpop.f32.mrb[0].mxu0
  %v1123 = vadd.f32 %v1010, %v1122
  %v1124 = vpop.f32.mrb[0].mxu0
  %v1125 = vadd.f32 %v1012, %v1124
  %v1126 = vpop.f32.mrb[0].mxu0
  %v1127 = vadd.f32 %v1014, %v1126
  %v1128 = vpop.f32.mrb[0].mxu0
  %v1129 = vadd.f32 %v1016, %v1128
  %1130 = vmatprep.mubr.bf16.mxu0 %v181
  %1131 = vmatmul.mubr.bf16.gmra.mrb[0].mxu0 %v180
  %v1132 = vpop.f32.mrb[0].mxu0
  %v1133 = vadd.f32 %v1020, %v1132
  %v1134 = vpop.f32.mrb[0].mxu0
  %v1135 = vadd.f32 %v1022, %v1134
  %v1136 = vpop.f32.mrb[0].mxu0
  %v1137 = vadd.f32 %v1024, %v1136
  %v1138 = vpop.f32.mrb[0].mxu0
  %v1139 = vadd.f32 %v1026, %v1138
  %1140 = vmatprep.mubr.bf16.mxu0 %v188
  %1141 = vmatmul.mubr.bf16.gmra.mrb[0].mxu0 %v187
  %v1142 = vpop.f32.mrb[0].mxu0
  %v1143 = vadd.f32 %v1030, %v1142
  %v1144 = vpop.f32.mrb[0].mxu0
  %v1145 = vadd.f32 %v1032, %v1144
  %v1146 = vpop.f32.mrb[0].mxu0
  %v1147 = vadd.f32 %v1034, %v1146
  %v1148 = vpop.f32.mrb[0].mxu0
  %v1149 = vadd.f32 %v1036, %v1148
  %1150 = vmatprep.mubr.bf16.mxu0 %v195
  %1151 = vmatmul.mubr.bf16.gmra.mrb[0].mxu0 %v194
  %v1152 = vpop.f32.mrb[0].mxu0
  %v1153 = vadd.f32 %v1040, %v1152
  %v1154 = vpop.f32.mrb[0].mxu0
  %v1155 = vadd.f32 %v1042, %v1154
  %v1156 = vpop.f32.mrb[0].mxu0
  %v1157 = vadd.f32 %v1044, %v1156
  %v1158 = vpop.f32.mrb[0].mxu0
  %v1159 = vadd.f32 %v1046, %v1158
  %1160 = vdwg.mxu0
  %1161 = vmatprep.subr.bf16.mxu0 %v698
  %1162 = vmatpush1.bf16.msra.mxu0 %v697
  %1163 = vmatprep.subr.bf16.mxu0 0
  %1164 = vmatpush1.bf16.msra.mxu0 0
  %1165 = vmatprep.subr.bf16.mxu0 0
  %1166 = vmatpush1.bf16.msra.mxu0 0
  %1167 = vmatprep.subr.bf16.mxu0 0
  %1168 = vmatpush1.bf16.msra.mxu0 0
  %1169 = vmatprep.subr.bf16.mxu0 0
  %1170 = vmatpush1.bf16.msra.mxu0 0
  %1171 = vmatprep.subr.bf16.mxu0 0
  %1172 = vmatpush1.bf16.msra.mxu0 0
  %1173 = vmatprep.subr.bf16.mxu0 0
  %1174 = vmatpush1.bf16.msra.mxu0 0
  %1175 = vmatprep.subr.bf16.mxu0 0
  %1176 = vmatpush1.bf16.msra.mxu0 0
  %1177 = vmatprep.subr.bf16.mxu0 0
  %1178 = vmatpush1.bf16.msra.mxu0 0
  %1179 = vmatprep.subr.bf16.mxu0 0
  %1180 = vmatpush1.bf16.msra.mxu0 0
  %1181 = vmatprep.subr.bf16.mxu0 0
  %1182 = vmatpush1.bf16.msra.mxu0 0
  %1183 = vmatprep.subr.bf16.mxu0 0
  %1184 = vmatpush1.bf16.msra.mxu0 0
  %1185 = vmatprep.subr.bf16.mxu0 0
  %1186 = vmatpush1.bf16.msra.mxu0 0
  %1187 = vmatprep.subr.bf16.mxu0 0
  %1188 = vmatpush1.bf16.msra.mxu0 0
  %1189 = vmatprep.subr.bf16.mxu0 0
  %1190 = vmatpush1.bf16.msra.mxu0 0
  %1191 = vmatprep.subr.bf16.mxu0 0
  %1192 = vmatpush1.bf16.msra.mxu0 0
  %1193 = vmatprep.mubr.bf16.mxu0 0
  %1194 = vmatmul.mubr.bf16.gmra.mrb[0].mxu0 %v799
  %v1195 = vpop.f32.mrb[0].mxu0
  %v1196 = vadd.f32 %v1083, %v1195
  %v1197 = vpop.f32.mrb[0].mxu0
  %v1198 = vadd.f32 %v1085, %v1197
  %v1199 = vpop.f32.mrb[0].mxu0
  %v1200 = vadd.f32 %v1087, %v1199
  %v1201 = vpop.f32.mrb[0].mxu0
  %v1202 = vadd.f32 %v1089, %v1201
  %1203 = vmatprep.mubr.bf16.mxu0 0
  %1204 = vmatmul.mubr.bf16.gmra.mrb[0].mxu0 %v802
  %v1205 = vpop.f32.mrb[0].mxu0
  %v1206 = vadd.f32 %v1093, %v1205
  %v1207 = vpop.f32.mrb[0].mxu0
  %v1208 = vadd.f32 %v1095, %v1207
  %v1209 = vpop.f32.mrb[0].mxu0
  %v1210 = vadd.f32 %v1097, %v1209
  %v1211 = vpop.f32.mrb[0].mxu0
  %v1212 = vadd.f32 %v1099, %v1211
  %1213 = vmatprep.mubr.bf16.mxu0 0
  %1214 = vmatmul.mubr.bf16.gmra.mrb[0].mxu0 %v805
  %v1215 = vpop.f32.mrb[0].mxu0
  %v1216 = vadd.f32 %v1103, %v1215
  %v1217 = vpop.f32.mrb[0].mxu0
  %v1218 = vadd.f32 %v1105, %v1217
  %v1219 = vpop.f32.mrb[0].mxu0
  %v1220 = vadd.f32 %v1107, %v1219
  %v1221 = vpop.f32.mrb[0].mxu0
  %v1222 = vadd.f32 %v1109, %v1221
  %1223 = vmatprep.mubr.bf16.mxu0 0
  %1224 = vmatmul.mubr.bf16.gmra.mrb[0].mxu0 %v808
  %v1225 = vpop.f32.mrb[0].mxu0
  %v1226 = vadd.f32 %v1113, %v1225
  %v1227 = vpop.f32.mrb[0].mxu0
  %v1228 = vadd.f32 %v1115, %v1227
  %v1229 = vpop.f32.mrb[0].mxu0
  %v1230 = vadd.f32 %v1117, %v1229
  %v1231 = vpop.f32.mrb[0].mxu0
  %v1232 = vadd.f32 %v1119, %v1231
  %1233 = vmatprep.mubr.bf16.mxu0 0
  %1234 = vmatmul.mubr.bf16.gmra.mrb[0].mxu0 %v811
  %v1235 = vpop.f32.mrb[0].mxu0
  %v1236 = vadd.f32 %v1123, %v1235
  %v1237 = vpop.f32.mrb[0].mxu0
  %v1238 = vadd.f32 %v1125, %v1237
  %v1239 = vpop.f32.mrb[0].mxu0
  %v1240 = vadd.f32 %v1127, %v1239
  %v1241 = vpop.f32.mrb[0].mxu0
  %v1242 = vadd.f32 %v1129, %v1241
  %1243 = vmatprep.mubr.bf16.mxu0 0
  %1244 = vmatmul.mubr.bf16.gmra.mrb[0].mxu0 %v814
  %v1245 = vpop.f32.mrb[0].mxu0
  %v1246 = vadd.f32 %v1133, %v1245
  %v1247 = vpop.f32.mrb[0].mxu0
  %v1248 = vadd.f32 %v1135, %v1247
  %v1249 = vpop.f32.mrb[0].mxu0
  %v1250 = vadd.f32 %v1137, %v1249
  %v1251 = vpop.f32.mrb[0].mxu0
  %v1252 = vadd.f32 %v1139, %v1251
  %1253 = vmatprep.mubr.bf16.mxu0 0
  %1254 = vmatmul.mubr.bf16.gmra.mrb[0].mxu0 %v817
  %v1255 = vpop.f32.mrb[0].mxu0
  %v1256 = vadd.f32 %v1143, %v1255
  %v1257 = vpop.f32.mrb[0].mxu0
  %v1258 = vadd.f32 %v1145, %v1257
  %v1259 = vpop.f32.mrb[0].mxu0
  %v1260 = vadd.f32 %v1147, %v1259
  %v1261 = vpop.f32.mrb[0].mxu0
  %v1262 = vadd.f32 %v1149, %v1261
  %1263 = vmatprep.mubr.bf16.mxu0 0
  %1264 = vmatmul.mubr.bf16.gmra.mrb[0].mxu0 %v820
  %v1265 = vpop.f32.mrb[0].mxu0
  %v1266 = vadd.f32 %v1153, %v1265
  %v1267 = vpop.f32.mrb[0].mxu0
  %v1268 = vadd.f32 %v1155, %v1267
  %v1269 = vpop.f32.mrb[0].mxu0
  %v1270 = vadd.f32 %v1157, %v1269
  %v1271 = vpop.f32.mrb[0].mxu0
  %v1272 = vadd.f32 %v1159, %v1271
  %1273 = vdwg.mxu0
  %vm1274 = vcmp.ge.f32.partialorder %v1196, 0.0
  %vm1275 = vcmp.ge.f32.partialorder %v1198, 0.0
  %vm1276 = vcmp.ge.f32.partialorder %v1200, 0.0
  %vm1277 = vcmp.ge.f32.partialorder %v1202, 0.0
  %vm1278 = vcmp.ge.f32.partialorder %v1206, 0.0
  %vm1279 = vcmp.ge.f32.partialorder %v1208, 0.0
  %vm1280 = vcmp.ge.f32.partialorder %v1210, 0.0
  %vm1281 = vcmp.ge.f32.partialorder %v1212, 0.0
  %vm1282 = vcmp.ge.f32.partialorder %v1216, 0.0
  %vm1283 = vcmp.ge.f32.partialorder %v1218, 0.0
  %vm1284 = vcmp.ge.f32.partialorder %v1220, 0.0
  %vm1285 = vcmp.ge.f32.partialorder %v1222, 0.0
  %vm1286 = vcmp.ge.f32.partialorder %v1226, 0.0
  %vm1287 = vcmp.ge.f32.partialorder %v1228, 0.0
  %vm1288 = vcmp.ge.f32.partialorder %v1230, 0.0
  %vm1289 = vcmp.ge.f32.partialorder %v1232, 0.0
  %vm1290 = vcmp.ge.f32.partialorder %v1236, 0.0
  %vm1291 = vcmp.ge.f32.partialorder %v1238, 0.0
  %vm1292 = vcmp.ge.f32.partialorder %v1240, 0.0
  %vm1293 = vcmp.ge.f32.partialorder %v1242, 0.0
  %vm1294 = vcmp.ge.f32.partialorder %v1246, 0.0
  %vm1295 = vcmp.ge.f32.partialorder %v1248, 0.0
  %vm1296 = vcmp.ge.f32.partialorder %v1250, 0.0
  %vm1297 = vcmp.ge.f32.partialorder %v1252, 0.0
  %vm1298 = vcmp.ge.f32.partialorder %v1256, 0.0
  %vm1299 = vcmp.ge.f32.partialorder %v1258, 0.0
  %vm1300 = vcmp.ge.f32.partialorder %v1260, 0.0
  %vm1301 = vcmp.ge.f32.partialorder %v1262, 0.0
  %vm1302 = vcmp.ge.f32.partialorder %v1266, 0.0
  %vm1303 = vcmp.ge.f32.partialorder %v1268, 0.0
  %vm1304 = vcmp.ge.f32.partialorder %v1270, 0.0
  %vm1305 = vcmp.ge.f32.partialorder %v1272, 0.0
  %v1306 = vmul.f32 %v1196, 0.2
  %v1307 = vmul.f32 %v1198, 0.2
  %v1308 = vmul.f32 %v1200, 0.2
  %v1309 = vmul.f32 %v1202, 0.2
  %v1310 = vmul.f32 %v1206, 0.2
  %v1311 = vmul.f32 %v1208, 0.2
  %v1312 = vmul.f32 %v1210, 0.2
  %v1313 = vmul.f32 %v1212, 0.2
  %v1314 = vmul.f32 %v1216, 0.2
  %v1315 = vmul.f32 %v1218, 0.2
  %v1316 = vmul.f32 %v1220, 0.2
  %v1317 = vmul.f32 %v1222, 0.2
  %v1318 = vmul.f32 %v1226, 0.2
  %v1319 = vmul.f32 %v1228, 0.2
  %v1320 = vmul.f32 %v1230, 0.2
  %v1321 = vmul.f32 %v1232, 0.2
  %v1322 = vmul.f32 %v1236, 0.2
  %v1323 = vmul.f32 %v1238, 0.2
  %v1324 = vmul.f32 %v1240, 0.2
  %v1325 = vmul.f32 %v1242, 0.2
  %v1326 = vmul.f32 %v1246, 0.2
  %v1327 = vmul.f32 %v1248, 0.2
  %v1328 = vmul.f32 %v1250, 0.2
  %v1329 = vmul.f32 %v1252, 0.2
  %v1330 = vmul.f32 %v1256, 0.2
  %v1331 = vmul.f32 %v1258, 0.2
  %v1332 = vmul.f32 %v1260, 0.2
  %v1333 = vmul.f32 %v1262, 0.2
  %v1334 = vmul.f32 %v1266, 0.2
  %v1335 = vmul.f32 %v1268, 0.2
  %v1336 = vmul.f32 %v1270, 0.2
  %v1337 = vmul.f32 %v1272, 0.2
  %v1338 = vsel %vm1274, %v1196, %v1306
  %v1339 = vsel %vm1275, %v1198, %v1307
  %v1340 = vsel %vm1276, %v1200, %v1308
  %v1341 = vsel %vm1277, %v1202, %v1309
  %v1342 = vsel %vm1278, %v1206, %v1310
  %v1343 = vsel %vm1279, %v1208, %v1311
  %v1344 = vsel %vm1280, %v1210, %v1312
  %v1345 = vsel %vm1281, %v1212, %v1313
  %v1346 = vsel %vm1282, %v1216, %v1314
  %v1347 = vsel %vm1283, %v1218, %v1315
  %v1348 = vsel %vm1284, %v1220, %v1316
  %v1349 = vsel %vm1285, %v1222, %v1317
  %v1350 = vsel %vm1286, %v1226, %v1318
  %v1351 = vsel %vm1287, %v1228, %v1319
  %v1352 = vsel %vm1288, %v1230, %v1320
  %v1353 = vsel %vm1289, %v1232, %v1321
  %v1354 = vsel %vm1290, %v1236, %v1322
  %v1355 = vsel %vm1291, %v1238, %v1323
  %v1356 = vsel %vm1292, %v1240, %v1324
  %v1357 = vsel %vm1293, %v1242, %v1325
  %v1358 = vsel %vm1294, %v1246, %v1326
  %v1359 = vsel %vm1295, %v1248, %v1327
  %v1360 = vsel %vm1296, %v1250, %v1328
  %v1361 = vsel %vm1297, %v1252, %v1329
  %v1362 = vsel %vm1298, %v1256, %v1330
  %v1363 = vsel %vm1299, %v1258, %v1331
  %v1364 = vsel %vm1300, %v1260, %v1332
  %v1365 = vsel %vm1301, %v1262, %v1333
  %v1366 = vsel %vm1302, %v1266, %v1334
  %v1367 = vsel %vm1303, %v1268, %v1335
  %v1368 = vsel %vm1304, %v1270, %v1336
  %v1369 = vsel %vm1305, %v1272, %v1337
  %v1370 = vpack.c.bf16 %v1340, %v1338
  %v1371 = vpack.c.bf16 %v1341, %v1339
  %v1372 = vpack.c.bf16 %v1344, %v1342
  %v1373 = vpack.c.bf16 %v1345, %v1343
  %v1374 = vpack.c.bf16 %v1348, %v1346
  %v1375 = vpack.c.bf16 %v1349, %v1347
  %v1376 = vpack.c.bf16 %v1352, %v1350
  %v1377 = vpack.c.bf16 %v1353, %v1351
  %v1378 = vpack.c.bf16 %v1356, %v1354
  %v1379 = vpack.c.bf16 %v1357, %v1355
  %v1380 = vpack.c.bf16 %v1360, %v1358
  %v1381 = vpack.c.bf16 %v1361, %v1359
  %v1382 = vpack.c.bf16 %v1364, %v1362
  %v1383 = vpack.c.bf16 %v1365, %v1363
  %v1384 = vpack.c.bf16 %v1368, %v1366
  %v1385 = vpack.c.bf16 %v1369, %v1367
  %v1386 = vld [vmem:[%s3] sm:$0xf]
  %v1387 = vld [vmem:[%s3 + $0x4] sm:$0xf]
  %v1388 = vld [vmem:[%s3 + $0x8] sm:$0xf]
  %v1389 = vld [vmem:[%s3 + $0xc] sm:$0xf]
  %v1390 = vld [vmem:[%s3 + $0x10] sm:$0xf]
  %v1391 = vld [vmem:[%s3 + $0x14] sm:$0xf]
  %v1392 = vld [vmem:[%s3 + $0x18] sm:$0xf]
  %v1393 = vld [vmem:[%s3 + $0x1c] sm:$0xf]
  %v1394 = vld [vmem:[%s3 + $0x20] sm:$0xf]
  %v1395 = vld [vmem:[%s3 + $0x24] sm:$0xf]
  %v1396 = vld [vmem:[%s3 + $0x28] sm:$0xf]
  %v1397 = vld [vmem:[%s3 + $0x2c] sm:$0xf]
  %v1398 = vld [vmem:[%s3 + $0x30] sm:$0xf]
  %v1399 = vld [vmem:[%s3 + $0x34] sm:$0xf]
  %v1400 = vld [vmem:[%s3 + $0x38] sm:$0xf]
  %v1401 = vld [vmem:[%s3 + $0x3c] sm:$0xf]
  %v1402 = vld [vmem:[%s3 + $0x40] sm:$0xf]
  %v1403 = vld [vmem:[%s3 + $0x44] sm:$0xf]
  %v1404 = vld [vmem:[%s3 + $0x48] sm:$0xf]
  %v1405 = vld [vmem:[%s3 + $0x4c] sm:$0xf]
  %v1406 = vld [vmem:[%s3 + $0x50] sm:$0xf]
  %v1407 = vld [vmem:[%s3 + $0x54] sm:$0xf]
  %v1408 = vld [vmem:[%s3 + $0x58] sm:$0xf]
  %v1409 = vld [vmem:[%s3 + $0x5c] sm:$0xf]
  %v1410 = vld [vmem:[%s3 + $0x60] sm:$0xf]
  %v1411 = vld [vmem:[%s3 + $0x64] sm:$0xf]
  %v1412 = vld [vmem:[%s3 + $0x68] sm:$0xf]
  %v1413 = vld [vmem:[%s3 + $0x6c] sm:$0xf]
  %v1414 = vld [vmem:[%s3 + $0x70] sm:$0xf]
  %v1415 = vld [vmem:[%s3 + $0x74] sm:$0xf]
  %v1416 = vld [vmem:[%s3 + $0x78] sm:$0xf]
  %v1417 = vld [vmem:[%s3 + $0x7c] sm:$0xf]
  %v1418 = vld [vmem:[%s4] sm:$0x1]
  %v1420 = vlaneseq
  %v1421 = vshrl.u32 %v1420, 7
  %v1422 = vsub.s32 0, %v1421
  %v1423 = vrot.slane %v1418, %v1422
  %v1457 = vunpack.c.l.b16 %v1386
  %v1458 = vunpack.c.l.b16 %v1387
  %v1459 = vunpack.c.l.b16 %v1388
  %v1460 = vunpack.c.l.b16 %v1389
  %v1461 = vunpack.c.l.b16 %v1390
  %v1462 = vunpack.c.l.b16 %v1391
  %v1463 = vunpack.c.l.b16 %v1392
  %v1464 = vunpack.c.l.b16 %v1393
  %v1465 = vunpack.c.l.b16 %v1394
  %v1466 = vunpack.c.l.b16 %v1395
  %v1467 = vunpack.c.l.b16 %v1396
  %v1468 = vunpack.c.l.b16 %v1397
  %v1469 = vunpack.c.l.b16 %v1398
  %v1470 = vunpack.c.l.b16 %v1399
  %v1471 = vunpack.c.l.b16 %v1400
  %v1472 = vunpack.c.l.b16 %v1401
  %v1473 = vunpack.c.l.b16 %v1402
  %v1474 = vunpack.c.l.b16 %v1403
  %v1475 = vunpack.c.l.b16 %v1404
  %v1476 = vunpack.c.l.b16 %v1405
  %v1477 = vunpack.c.l.b16 %v1406
  %v1478 = vunpack.c.l.b16 %v1407
  %v1479 = vunpack.c.l.b16 %v1408
  %v1480 = vunpack.c.l.b16 %v1409
  %v1481 = vunpack.c.l.b16 %v1410
  %v1482 = vunpack.c.l.b16 %v1411
  %v1483 = vunpack.c.l.b16 %v1412
  %v1484 = vunpack.c.l.b16 %v1413
  %v1485 = vunpack.c.l.b16 %v1414
  %v1486 = vunpack.c.l.b16 %v1415
  %v1487 = vunpack.c.l.b16 %v1416
  %v1488 = vunpack.c.l.b16 %v1417
  %v1489 = vpack.c.b16 %v1458, %v1457
  %v1490 = vpack.c.b16 %v1460, %v1459
  %v1491 = vpack.c.b16 %v1462, %v1461
  %v1492 = vpack.c.b16 %v1464, %v1463
  %v1493 = vpack.c.b16 %v1466, %v1465
  %v1494 = vpack.c.b16 %v1468, %v1467
  %v1495 = vpack.c.b16 %v1470, %v1469
  %v1496 = vpack.c.b16 %v1472, %v1471
  %v1497 = vpack.c.b16 %v1474, %v1473
  %v1498 = vpack.c.b16 %v1476, %v1475
  %v1499 = vpack.c.b16 %v1478, %v1477
  %v1500 = vpack.c.b16 %v1480, %v1479
  %v1501 = vpack.c.b16 %v1482, %v1481
  %v1502 = vpack.c.b16 %v1484, %v1483
  %v1503 = vpack.c.b16 %v1486, %v1485
  %v1504 = vpack.c.b16 %v1488, %v1487
  %1521 = vmatprep.subr.bf16.mxu0 0
  %1522 = vmatpush1.bf16.msra.mxu0 %v1489
  %1523 = vmatprep.subr.bf16.mxu0 0
  %1524 = vmatpush1.bf16.msra.mxu0 %v1490
  %1525 = vmatprep.subr.bf16.mxu0 0
  %1526 = vmatpush1.bf16.msra.mxu0 %v1491
  %1527 = vmatprep.subr.bf16.mxu0 0
  %1528 = vmatpush1.bf16.msra.mxu0 %v1492
  %1529 = vmatprep.subr.bf16.mxu0 0
  %1530 = vmatpush1.bf16.msra.mxu0 %v1493
  %1531 = vmatprep.subr.bf16.mxu0 0
  %1532 = vmatpush1.bf16.msra.mxu0 %v1494
  %1533 = vmatprep.subr.bf16.mxu0 0
  %1534 = vmatpush1.bf16.msra.mxu0 %v1495
  %1535 = vmatprep.subr.bf16.mxu0 0
  %1536 = vmatpush1.bf16.msra.mxu0 %v1496
  %1537 = vmatprep.subr.bf16.mxu0 0
  %1538 = vmatpush1.bf16.msra.mxu0 %v1497
  %1539 = vmatprep.subr.bf16.mxu0 0
  %1540 = vmatpush1.bf16.msra.mxu0 %v1498
  %1541 = vmatprep.subr.bf16.mxu0 0
  %1542 = vmatpush1.bf16.msra.mxu0 %v1499
  %1543 = vmatprep.subr.bf16.mxu0 0
  %1544 = vmatpush1.bf16.msra.mxu0 %v1500
  %1545 = vmatprep.subr.bf16.mxu0 0
  %1546 = vmatpush1.bf16.msra.mxu0 %v1501
  %1547 = vmatprep.subr.bf16.mxu0 0
  %1548 = vmatpush1.bf16.msra.mxu0 %v1502
  %1549 = vmatprep.subr.bf16.mxu0 0
  %1550 = vmatpush1.bf16.msra.mxu0 %v1503
  %1551 = vmatprep.subr.bf16.mxu0 0
  %1552 = vmatpush1.bf16.msra.mxu0 %v1504
  %1553 = vmatprep.mubr.bf16.mxu0 %v1371
  %1554 = vmatmul.mubr.bf16.gmra.mrb[0].mxu0 %v1370
  %v1555 = vpop.f32.mrb[0].mxu0
  %v1556 = vadd.f32 %v1423, %v1555
  %v1557 = vpop.f32.mrb[0].mxu0
  %v1558 = vpop.f32.mrb[0].mxu0
  %v1559 = vadd.f32 %v1423, %v1558
  %v1560 = vpop.f32.mrb[0].mxu0
  %1561 = vmatprep.mubr.bf16.mxu0 %v1373
  %1562 = vmatmul.mubr.bf16.gmra.mrb[0].mxu0 %v1372
  %v1563 = vpop.f32.mrb[0].mxu0
  %v1564 = vadd.f32 %v1423, %v1563
  %v1565 = vpop.f32.mrb[0].mxu0
  %v1566 = vpop.f32.mrb[0].mxu0
  %v1567 = vadd.f32 %v1423, %v1566
  %v1568 = vpop.f32.mrb[0].mxu0
  %1569 = vmatprep.mubr.bf16.mxu0 %v1375
  %1570 = vmatmul.mubr.bf16.gmra.mrb[0].mxu0 %v1374
  %v1571 = vpop.f32.mrb[0].mxu0
  %v1572 = vadd.f32 %v1423, %v1571
  %v1573 = vpop.f32.mrb[0].mxu0
  %v1574 = vpop.f32.mrb[0].mxu0
  %v1575 = vadd.f32 %v1423, %v1574
  %v1576 = vpop.f32.mrb[0].mxu0
  %1577 = vmatprep.mubr.bf16.mxu0 %v1377
  %1578 = vmatmul.mubr.bf16.gmra.mrb[0].mxu0 %v1376
  %v1579 = vpop.f32.mrb[0].mxu0
  %v1580 = vadd.f32 %v1423, %v1579
  %v1581 = vpop.f32.mrb[0].mxu0
  %v1582 = vpop.f32.mrb[0].mxu0
  %v1583 = vadd.f32 %v1423, %v1582
  %v1584 = vpop.f32.mrb[0].mxu0
  %1585 = vmatprep.mubr.bf16.mxu0 %v1379
  %1586 = vmatmul.mubr.bf16.gmra.mrb[0].mxu0 %v1378
  %v1587 = vpop.f32.mrb[0].mxu0
  %v1588 = vadd.f32 %v1423, %v1587
  %v1589 = vpop.f32.mrb[0].mxu0
  %v1590 = vpop.f32.mrb[0].mxu0
  %v1591 = vadd.f32 %v1423, %v1590
  %v1592 = vpop.f32.mrb[0].mxu0
  %1593 = vmatprep.mubr.bf16.mxu0 %v1381
  %1594 = vmatmul.mubr.bf16.gmra.mrb[0].mxu0 %v1380
  %v1595 = vpop.f32.mrb[0].mxu0
  %v1596 = vadd.f32 %v1423, %v1595
  %v1597 = vpop.f32.mrb[0].mxu0
  %v1598 = vpop.f32.mrb[0].mxu0
  %v1599 = vadd.f32 %v1423, %v1598
  %v1600 = vpop.f32.mrb[0].mxu0
  %1601 = vmatprep.mubr.bf16.mxu0 %v1383
  %1602 = vmatmul.mubr.bf16.gmra.mrb[0].mxu0 %v1382
  %v1603 = vpop.f32.mrb[0].mxu0
  %v1604 = vadd.f32 %v1423, %v1603
  %v1605 = vpop.f32.mrb[0].mxu0
  %v1606 = vpop.f32.mrb[0].mxu0
  %v1607 = vadd.f32 %v1423, %v1606
  %v1608 = vpop.f32.mrb[0].mxu0
  %1609 = vmatprep.mubr.bf16.mxu0 %v1385
  %1610 = vmatmul.mubr.bf16.gmra.mrb[0].mxu0 %v1384
  %v1611 = vpop.f32.mrb[0].mxu0
  %v1612 = vadd.f32 %v1423, %v1611
  %v1613 = vpop.f32.mrb[0].mxu0
  %v1614 = vpop.f32.mrb[0].mxu0
  %v1615 = vadd.f32 %v1423, %v1614
  %v1616 = vpop.f32.mrb[0].mxu0
  %1617 = vdwg.mxu0
  %vm1618 = vcmp.ge.f32.partialorder %v1556, 0.0
  %vm1619 = vcmp.ge.f32.partialorder %v1559, 0.0
  %vm1620 = vcmp.ge.f32.partialorder %v1564, 0.0
  %vm1621 = vcmp.ge.f32.partialorder %v1567, 0.0
  %vm1622 = vcmp.ge.f32.partialorder %v1572, 0.0
  %vm1623 = vcmp.ge.f32.partialorder %v1575, 0.0
  %vm1624 = vcmp.ge.f32.partialorder %v1580, 0.0
  %vm1625 = vcmp.ge.f32.partialorder %v1583, 0.0
  %vm1626 = vcmp.ge.f32.partialorder %v1588, 0.0
  %vm1627 = vcmp.ge.f32.partialorder %v1591, 0.0
  %vm1628 = vcmp.ge.f32.partialorder %v1596, 0.0
  %vm1629 = vcmp.ge.f32.partialorder %v1599, 0.0
  %vm1630 = vcmp.ge.f32.partialorder %v1604, 0.0
  %vm1631 = vcmp.ge.f32.partialorder %v1607, 0.0
  %vm1632 = vcmp.ge.f32.partialorder %v1612, 0.0
  %vm1633 = vcmp.ge.f32.partialorder %v1615, 0.0
  %v1634 = vmul.f32 %v1556, 0.2
  %v1635 = vmul.f32 %v1559, 0.2
  %v1636 = vmul.f32 %v1564, 0.2
  %v1637 = vmul.f32 %v1567, 0.2
  %v1638 = vmul.f32 %v1572, 0.2
  %v1639 = vmul.f32 %v1575, 0.2
  %v1640 = vmul.f32 %v1580, 0.2
  %v1641 = vmul.f32 %v1583, 0.2
  %v1642 = vmul.f32 %v1588, 0.2
  %v1643 = vmul.f32 %v1591, 0.2
  %v1644 = vmul.f32 %v1596, 0.2
  %v1645 = vmul.f32 %v1599, 0.2
  %v1646 = vmul.f32 %v1604, 0.2
  %v1647 = vmul.f32 %v1607, 0.2
  %v1648 = vmul.f32 %v1612, 0.2
  %v1649 = vmul.f32 %v1615, 0.2
  %v1650 = vsel %vm1618, %v1556, %v1634
  %v1651 = vsel %vm1619, %v1559, %v1635
  %v1652 = vsel %vm1620, %v1564, %v1636
  %v1653 = vsel %vm1621, %v1567, %v1637
  %v1654 = vsel %vm1622, %v1572, %v1638
  %v1655 = vsel %vm1623, %v1575, %v1639
  %v1656 = vsel %vm1624, %v1580, %v1640
  %v1657 = vsel %vm1625, %v1583, %v1641
  %v1658 = vsel %vm1626, %v1588, %v1642
  %v1659 = vsel %vm1627, %v1591, %v1643
  %v1660 = vsel %vm1628, %v1596, %v1644
  %v1661 = vsel %vm1629, %v1599, %v1645
  %v1662 = vsel %vm1630, %v1604, %v1646
  %v1663 = vsel %vm1631, %v1607, %v1647
  %v1664 = vsel %vm1632, %v1612, %v1648
  %v1665 = vsel %vm1633, %v1615, %v1649
  %v1666 = vld [vmem:[%s5] sm:$0x1]
  %v1668 = vlaneseq
  %v1669 = vshrl.u32 %v1668, 7
  %v1670 = vsub.s32 0, %v1669
  %v1671 = vrot.slane %v1666, %v1670
  %v1673 = vmul.f32 %v1650, %v1671
  %v1674 = vmul.f32 %v1651, %v1671
  %v1675 = vmul.f32 %v1652, %v1671
  %v1676 = vmul.f32 %v1653, %v1671
  %v1677 = vmul.f32 %v1654, %v1671
  %v1678 = vmul.f32 %v1655, %v1671
  %v1679 = vmul.f32 %v1656, %v1671
  %v1680 = vmul.f32 %v1657, %v1671
  %v1681 = vmul.f32 %v1658, %v1671
  %v1682 = vmul.f32 %v1659, %v1671
  %v1683 = vmul.f32 %v1660, %v1671
  %v1684 = vmul.f32 %v1661, %v1671
  %v1685 = vmul.f32 %v1662, %v1671
  %v1686 = vmul.f32 %v1663, %v1671
  %v1687 = vmul.f32 %v1664, %v1671
  %v1688 = vmul.f32 %v1665, %v1671
  %1689 = vadd.xlane.f32.xlu0 %v1673
  %v1690 = vpop.xlane.xlu0 %1689
  %1691 = vadd.xlane.f32.xlu0 %v1674
  %v1692 = vpop.xlane.xlu0 %1691
  %1693 = vadd.xlane.f32.xlu0 %v1675
  %v1694 = vpop.xlane.xlu0 %1693
  %1695 = vadd.xlane.f32.xlu0 %v1676
  %v1696 = vpop.xlane.xlu0 %1695
  %1697 = vadd.xlane.f32.xlu0 %v1677
  %v1698 = vpop.xlane.xlu0 %1697
  %1699 = vadd.xlane.f32.xlu0 %v1678
  %v1700 = vpop.xlane.xlu0 %1699
  %1701 = vadd.xlane.f32.xlu0 %v1679
  %v1702 = vpop.xlane.xlu0 %1701
  %1703 = vadd.xlane.f32.xlu0 %v1680
  %v1704 = vpop.xlane.xlu0 %1703
  %1705 = vadd.xlane.f32.xlu0 %v1681
  %v1706 = vpop.xlane.xlu0 %1705
  %1707 = vadd.xlane.f32.xlu0 %v1682
  %v1708 = vpop.xlane.xlu0 %1707
  %1709 = vadd.xlane.f32.xlu0 %v1683
  %v1710 = vpop.xlane.xlu0 %1709
  %1711 = vadd.xlane.f32.xlu0 %v1684
  %v1712 = vpop.xlane.xlu0 %1711
  %1713 = vadd.xlane.f32.xlu0 %v1685
  %v1714 = vpop.xlane.xlu0 %1713
  %1715 = vadd.xlane.f32.xlu0 %v1686
  %v1716 = vpop.xlane.xlu0 %1715
  %1717 = vadd.xlane.f32.xlu0 %v1687
  %v1718 = vpop.xlane.xlu0 %1717
  %1719 = vadd.xlane.f32.xlu0 %v1688
  %v1720 = vpop.xlane.xlu0 %1719
  %v1721 = vld [vmem:[#allocation2] sm:$0x1]
  %v1723 = vlaneseq
  %v1724 = vshrl.u32 %v1723, 7
  %v1725 = vsub.s32 0, %v1724
  %v1726 = vrot.slane %v1721, %v1725
  %v1728 = vadd.f32 %v1690, %v1726
  %v1729 = vadd.f32 %v1692, %v1726
  %v1730 = vadd.f32 %v1694, %v1726
  %v1731 = vadd.f32 %v1696, %v1726
  %v1732 = vadd.f32 %v1698, %v1726
  %v1733 = vadd.f32 %v1700, %v1726
  %v1734 = vadd.f32 %v1702, %v1726
  %v1735 = vadd.f32 %v1704, %v1726
  %v1736 = vadd.f32 %v1706, %v1726
  %v1737 = vadd.f32 %v1708, %v1726
  %v1738 = vadd.f32 %v1710, %v1726
  %v1739 = vadd.f32 %v1712, %v1726
  %v1740 = vadd.f32 %v1714, %v1726
  %v1741 = vadd.f32 %v1716, %v1726
  %v1742 = vadd.f32 %v1718, %v1726
  %v1743 = vadd.f32 %v1720, %v1726
  %v1744 = vand.u32 2147483647, %v1728
  %v1745 = vand.u32 2147483647, %v1729
  %v1746 = vand.u32 2147483647, %v1730
  %v1747 = vand.u32 2147483647, %v1731
  %v1748 = vand.u32 2147483647, %v1732
  %v1749 = vand.u32 2147483647, %v1733
  %v1750 = vand.u32 2147483647, %v1734
  %v1751 = vand.u32 2147483647, %v1735
  %v1752 = vand.u32 2147483647, %v1736
  %v1753 = vand.u32 2147483647, %v1737
  %v1754 = vand.u32 2147483647, %v1738
  %v1755 = vand.u32 2147483647, %v1739
  %v1756 = vand.u32 2147483647, %v1740
  %v1757 = vand.u32 2147483647, %v1741
  %v1758 = vand.u32 2147483647, %v1742
  %v1759 = vand.u32 2147483647, %v1743
  %v1760 = vsub.f32 0.0, %v1744
  %v1761 = vsub.f32 0.0, %v1745
  %v1762 = vsub.f32 0.0, %v1746
  %v1763 = vsub.f32 0.0, %v1747
  %v1764 = vsub.f32 0.0, %v1748
  %v1765 = vsub.f32 0.0, %v1749
  %v1766 = vsub.f32 0.0, %v1750
  %v1767 = vsub.f32 0.0, %v1751
  %v1768 = vsub.f32 0.0, %v1752
  %v1769 = vsub.f32 0.0, %v1753
  %v1770 = vsub.f32 0.0, %v1754
  %v1771 = vsub.f32 0.0, %v1755
  %v1772 = vsub.f32 0.0, %v1756
  %v1773 = vsub.f32 0.0, %v1757
  %v1774 = vsub.f32 0.0, %v1758
  %v1775 = vsub.f32 0.0, %v1759
  %v1776 = vmul.f32 %v1760, 1.442695
  %v1777 = vpow.pop %v1776
  %v1778 = vmul.f32 %v1761, 1.442695
  %v1779 = vpow.pop %v1778
  %v1780 = vmul.f32 %v1762, 1.442695
  %v1781 = vpow.pop %v1780
  %v1782 = vmul.f32 %v1763, 1.442695
  %v1783 = vpow.pop %v1782
  %v1784 = vmul.f32 %v1764, 1.442695
  %v1785 = vpow.pop %v1784
  %v1786 = vmul.f32 %v1765, 1.442695
  %v1787 = vpow.pop %v1786
  %v1788 = vmul.f32 %v1766, 1.442695
  %v1789 = vpow.pop %v1788
  %v1790 = vmul.f32 %v1767, 1.442695
  %v1791 = vpow.pop %v1790
  %v1792 = vmul.f32 %v1768, 1.442695
  %v1793 = vpow.pop %v1792
  %v1794 = vmul.f32 %v1769, 1.442695
  %v1795 = vpow.pop %v1794
  %v1796 = vmul.f32 %v1770, 1.442695
  %v1797 = vpow.pop %v1796
  %v1798 = vmul.f32 %v1771, 1.442695
  %v1799 = vpow.pop %v1798
  %v1800 = vmul.f32 %v1772, 1.442695
  %v1801 = vpow.pop %v1800
  %v1802 = vmul.f32 %v1773, 1.442695
  %v1803 = vpow.pop %v1802
  %v1804 = vmul.f32 %v1774, 1.442695
  %v1805 = vpow.pop %v1804
  %v1806 = vmul.f32 %v1775, 1.442695
  %v1807 = vpow.pop %v1806
  %v1808 = vadd.f32 %v1777, 1.0
  %v1809 = vadd.f32 %v1779, 1.0
  %v1810 = vadd.f32 %v1781, 1.0
  %v1811 = vadd.f32 %v1783, 1.0
  %v1812 = vadd.f32 %v1785, 1.0
  %v1813 = vadd.f32 %v1787, 1.0
  %v1814 = vadd.f32 %v1789, 1.0
  %v1815 = vadd.f32 %v1791, 1.0
  %v1816 = vadd.f32 %v1793, 1.0
  %v1817 = vadd.f32 %v1795, 1.0
  %v1818 = vadd.f32 %v1797, 1.0
  %v1819 = vadd.f32 %v1799, 1.0
  %v1820 = vadd.f32 %v1801, 1.0
  %v1821 = vadd.f32 %v1803, 1.0
  %v1822 = vadd.f32 %v1805, 1.0
  %v1823 = vadd.f32 %v1807, 1.0
  %v1824 = vrcp.pop %v1808
  %v1825 = vmul.f32 1.0, %v1824
  %v1826 = vrcp.pop %v1809
  %v1827 = vmul.f32 1.0, %v1826
  %v1828 = vrcp.pop %v1810
  %v1829 = vmul.f32 1.0, %v1828
  %v1830 = vrcp.pop %v1811
  %v1831 = vmul.f32 1.0, %v1830
  %v1832 = vrcp.pop %v1812
  %v1833 = vmul.f32 1.0, %v1832
  %v1834 = vrcp.pop %v1813
  %v1835 = vmul.f32 1.0, %v1834
  %v1836 = vrcp.pop %v1814
  %v1837 = vmul.f32 1.0, %v1836
  %v1838 = vrcp.pop %v1815
  %v1839 = vmul.f32 1.0, %v1838
  %v1840 = vrcp.pop %v1816
  %v1841 = vmul.f32 1.0, %v1840
  %v1842 = vrcp.pop %v1817
  %v1843 = vmul.f32 1.0, %v1842
  %v1844 = vrcp.pop %v1818
  %v1845 = vmul.f32 1.0, %v1844
  %v1846 = vrcp.pop %v1819
  %v1847 = vmul.f32 1.0, %v1846
  %v1848 = vrcp.pop %v1820
  %v1849 = vmul.f32 1.0, %v1848
  %v1850 = vrcp.pop %v1821
  %v1851 = vmul.f32 1.0, %v1850
  %v1852 = vrcp.pop %v1822
  %v1853 = vmul.f32 1.0, %v1852
  %v1854 = vrcp.pop %v1823
  %v1855 = vmul.f32 1.0, %v1854
  %vm1856 = vcmp.ge.f32.partialorder %v1728, 0.0
  %vm1857 = vcmp.ge.f32.partialorder %v1729, 0.0
  %vm1858 = vcmp.ge.f32.partialorder %v1730, 0.0
  %vm1859 = vcmp.ge.f32.partialorder %v1731, 0.0
  %vm1860 = vcmp.ge.f32.partialorder %v1732, 0.0
  %vm1861 = vcmp.ge.f32.partialorder %v1733, 0.0
  %vm1862 = vcmp.ge.f32.partialorder %v1734, 0.0
  %vm1863 = vcmp.ge.f32.partialorder %v1735, 0.0
  %vm1864 = vcmp.ge.f32.partialorder %v1736, 0.0
  %vm1865 = vcmp.ge.f32.partialorder %v1737, 0.0
  %vm1866 = vcmp.ge.f32.partialorder %v1738, 0.0
  %vm1867 = vcmp.ge.f32.partialorder %v1739, 0.0
  %vm1868 = vcmp.ge.f32.partialorder %v1740, 0.0
  %vm1869 = vcmp.ge.f32.partialorder %v1741, 0.0
  %vm1870 = vcmp.ge.f32.partialorder %v1742, 0.0
  %vm1871 = vcmp.ge.f32.partialorder %v1743, 0.0
  %v1872 = vmul.f32 %v1777, %v1825
  %v1873 = vmul.f32 %v1779, %v1827
  %v1874 = vmul.f32 %v1781, %v1829
  %v1875 = vmul.f32 %v1783, %v1831
  %v1876 = vmul.f32 %v1785, %v1833
  %v1877 = vmul.f32 %v1787, %v1835
  %v1878 = vmul.f32 %v1789, %v1837
  %v1879 = vmul.f32 %v1791, %v1839
  %v1880 = vmul.f32 %v1793, %v1841
  %v1881 = vmul.f32 %v1795, %v1843
  %v1882 = vmul.f32 %v1797, %v1845
  %v1883 = vmul.f32 %v1799, %v1847
  %v1884 = vmul.f32 %v1801, %v1849
  %v1885 = vmul.f32 %v1803, %v1851
  %v1886 = vmul.f32 %v1805, %v1853
  %v1887 = vmul.f32 %v1807, %v1855
  %v1888 = vsel %vm1856, %v1825, %v1872
  %v1889 = vsel %vm1857, %v1827, %v1873
  %v1890 = vsel %vm1858, %v1829, %v1874
  %v1891 = vsel %vm1859, %v1831, %v1875
  %v1892 = vsel %vm1860, %v1833, %v1876
  %v1893 = vsel %vm1861, %v1835, %v1877
  %v1894 = vsel %vm1862, %v1837, %v1878
  %v1895 = vsel %vm1863, %v1839, %v1879
  %v1896 = vsel %vm1864, %v1841, %v1880
  %v1897 = vsel %vm1865, %v1843, %v1881
  %v1898 = vsel %vm1866, %v1845, %v1882
  %v1899 = vsel %vm1867, %v1847, %v1883
  %v1900 = vsel %vm1868, %v1849, %v1884
  %v1901 = vsel %vm1869, %v1851, %v1885
  %v1902 = vsel %vm1870, %v1853, %v1886
  %v1903 = vsel %vm1871, %v1855, %v1887
  %vm1904 = vcmask 7168
  %1905 = vst.msk [vmem:[%s7] sm:$0xff] %vm1904, %v1888
  %1906 = vst.msk [vmem:[%s7 + $0x8] sm:$0xff] %vm1904, %v1889
  %1907 = vst.msk [vmem:[%s7 + $0x10] sm:$0xff] %vm1904, %v1890
  %1908 = vst.msk [vmem:[%s7 + $0x18] sm:$0xff] %vm1904, %v1891
  %1909 = vst.msk [vmem:[%s7 + $0x20] sm:$0xff] %vm1904, %v1892
  %1910 = vst.msk [vmem:[%s7 + $0x28] sm:$0xff] %vm1904, %v1893
  %1911 = vst.msk [vmem:[%s7 + $0x30] sm:$0xff] %vm1904, %v1894
  %1912 = vst.msk [vmem:[%s7 + $0x38] sm:$0xff] %vm1904, %v1895
  %1913 = vst.msk [vmem:[%s7 + $0x40] sm:$0xff] %vm1904, %v1896
  %1914 = vst.msk [vmem:[%s7 + $0x48] sm:$0xff] %vm1904, %v1897
  %1915 = vst.msk [vmem:[%s7 + $0x50] sm:$0xff] %vm1904, %v1898
  %1916 = vst.msk [vmem:[%s7 + $0x58] sm:$0xff] %vm1904, %v1899
  %1917 = vst.msk [vmem:[%s7 + $0x60] sm:$0xff] %vm1904, %v1900
  %1918 = vst.msk [vmem:[%s7 + $0x68] sm:$0xff] %vm1904, %v1901
  %1919 = vst.msk [vmem:[%s7 + $0x70] sm:$0xff] %vm1904, %v1902
  %1920 = vst.msk [vmem:[%s7 + $0x78] sm:$0xff] %vm1904, %v1903
  // Predicated region
  $region30: #{tpu_custom_call.1} parent=0 // pred_check
    _
  $region31: #{tpu_custom_call.1} parent=0 // pred_check_branch
    %1922 = sbr.rel (0) target = $region33
  $region32: #{tpu_custom_call.1} parent=0 // pred_region
    _
  $region33: #{tpu_custom_call.1} parent=0 // pred_fallthru
    _
  // Predicated region
  $region34: #{tpu_custom_call.1} parent=0 // pred_check
    _
  $region35: #{tpu_custom_call.1} parent=0 // pred_check_branch
    %1924 = sbr.rel (0) target = $region37
  $region36: #{tpu_custom_call.1} parent=0 // pred_region
    _
  $region37: #{tpu_custom_call.1} parent=0 // pred_fallthru
    _

</llo_original>
